<compile_context>
chip_gen: v7x
topology: tpu7x:2x2x1
jax: 0.10.0
libtpu: 0.0.40
codegen_flags: <defaults>
</compile_context>

<pallas_src>
import functools

import jax
import jax.numpy as jnp
from jax.experimental import pallas as pl
from jax.experimental.pallas import tpu as pltpu

EPSILON = 1e-10
LN_EPS = 1e-5
C_PAD = 128          # lane-dense classifier width (real class_size padded up to this)


def _layernorm(x, g, b):
    mu = jnp.mean(x, axis=-1, keepdims=True)
    var = jnp.mean((x - mu) * (x - mu), axis=-1, keepdims=True)
    return (x - mu) * jax.lax.rsqrt(var + LN_EPS) * g + b


# --------------------------------------------------------------------------------------
# Fused kernel: transformer block + masked average pooling + classifier + log_softmax.
# One batch element per grid step; weights are grid-invariant inputs.
# --------------------------------------------------------------------------------------
def pplm_fused_kernel(
    mask_ref, h_ref, causal_ref,
    ln1_g_ref, ln1_b_ref,
    wq_ref, bq_ref, wk_ref, bk_ref, wv_ref, bv_ref,
    wproj_ref, bproj_ref,
    ln2_g_ref, ln2_b_ref,
    wfc_ref, bfc_ref, wout_ref, bout_ref,
    lnf_g_ref, lnf_b_ref,
    wcls_ref, bcls_ref,
    o_ref,
    *, num_classes,
):
    h = h_ref[0]                                      # (S, D) f32
    D = h.shape[-1]

    # --- attention sub-block (pre-LN, single head, causal) ---
    a = _layernorm(h, ln1_g_ref[...], ln1_b_ref[...])
    a16 = a.astype(jnp.bfloat16)
    q = jnp.dot(a16, wq_ref[...], preferred_element_type=jnp.float32) + bq_ref[...]
    k = jnp.dot(a16, wk_ref[...], preferred_element_type=jnp.float32) + bk_ref[...]
    v = jnp.dot(a16, wv_ref[...], preferred_element_type=jnp.float32) + bv_ref[...]

    scale = 1.0 / (float(D) ** 0.5)
    # q @ k^T without materializing a transpose: contract dim 1 of q with dim 1 of k.
    scores = jax.lax.dot_general(
        q.astype(jnp.bfloat16), k.astype(jnp.bfloat16),
        dimension_numbers=(((1,), (1,)), ((), ())),
        preferred_element_type=jnp.float32,
    ) * scale
    scores = scores + causal_ref[...]                 # precomputed additive causal mask (0 / -1e9)

    m = jnp.max(scores, axis=-1, keepdims=True)
    p = jnp.exp(scores - m)
    p = p * pl.reciprocal(jnp.sum(p, axis=-1, keepdims=True), approx=True)

    attn = jnp.dot(p.astype(jnp.bfloat16), v.astype(jnp.bfloat16),
                   preferred_element_type=jnp.float32)                        # (S, D)
    attn = jnp.dot(attn.astype(jnp.bfloat16), wproj_ref[...],
                   preferred_element_type=jnp.float32) + bproj_ref[...]
    h = h + attn

    # --- MLP sub-block ---
    a2 = _layernorm(h, ln2_g_ref[...], ln2_b_ref[...])
    hid = jnp.dot(a2.astype(jnp.bfloat16), wfc_ref[...],
                  preferred_element_type=jnp.float32) + bfc_ref[...]
    hid = jax.nn.gelu(hid, approximate=True)
    mlp = jnp.dot(hid.astype(jnp.bfloat16), wout_ref[...],
                  preferred_element_type=jnp.float32) + bout_ref[...]
    h = h + mlp

    # --- final layer norm (GPT2 ln_f) ---
    h = _layernorm(h, lnf_g_ref[...], lnf_b_ref[...])

    # --- fused PPLM head: masked average pooling as an MXU contraction + classifier + log_softmax
    mask_row = mask_ref[0]                                                    # (1, S) f32 {0,1}
    summed = jnp.dot(mask_row, h, preferred_element_type=jnp.float32)         # (1, D)
    denom = jnp.sum(mask_row) + EPSILON
    avg = summed / denom

    logits = jnp.dot(avg.astype(jnp.bfloat16), wcls_ref[...],
                     preferred_element_type=jnp.float32) + bcls_ref[...]      # (1, C_PAD)
    c_pad = logits.shape[-1]
    lane = jax.lax.broadcasted_iota(jnp.int32, (1, c_pad), 1)
    logits = jnp.where(lane < num_classes, logits, jnp.float32(-1e30))        # mask padded lanes

    mmax = jnp.max(logits, axis=-1, keepdims=True)
    shifted = logits - mmax
    lse = jnp.log(jnp.sum(jnp.exp(shifted), axis=-1, keepdims=True))
    o_ref[0] = shifted - lse                                                  # (1, C_PAD) log-probs


def _vmem_limit_bytes(arrays, out_bytes):
    # double-buffered inputs + double-buffered output + headroom for intermediates;
    # clamp to stay safely below physical VMEM on every generation (v7x = 64 MiB).
    total = sum(2 * int(a.size) * jnp.dtype(a.dtype).itemsize for a in arrays) + 2 * out_bytes
    return int(min(max(total + (8 << 20), 16 << 20), 48 << 20))


def pplm_forward_fused(mask3, h, causal, weights, num_classes):
    """mask3: (B,1,S) f32; h: (B,S,D) f32; causal: (S,S) f32; weights: list of 2-D arrays."""
    B, S, D = h.shape
    c_pad = weights[-1].shape[-1]                      # lane-dense padded classifier width

    in_specs = [
        pl.BlockSpec((1, 1, S), lambda b: (b, 0, 0)),  # token mask row
        pl.BlockSpec((1, S, D), lambda b: (b, 0, 0)),  # embedded hidden state
        pl.BlockSpec((S, S), lambda b: (0, 0)),        # causal additive mask (grid-invariant)
    ]
    for w in weights:
        in_specs.append(pl.BlockSpec(w.shape, lambda b: (0, 0)))   # grid-invariant weights
    out_spec = pl.BlockSpec((1, 1, c_pad), lambda b: (b, 0, 0))

    kernel = functools.partial(pplm_fused_kernel, num_classes=num_classes)
    out = pl.pallas_call(
        kernel,
        grid=(B,),
        in_specs=in_specs,
        out_specs=out_spec,
        out_shape=jax.ShapeDtypeStruct((B, 1, c_pad), jnp.float32),
        compiler_params=pltpu.CompilerParams(
            dimension_semantics=("parallel",),
            vmem_limit_bytes=_vmem_limit_bytes([mask3, h, causal] + list(weights),
                                               B * c_pad * 4),
        ),
    )(mask3, h, causal, *weights)
    return out[:, 0, :]                                # (B, C_PAD)


# --------------------------------------------------------------------------------------
# Parameters + model wrapper (glue: embedding lookup + parameter plumbing).
# --------------------------------------------------------------------------------------
def init_params(key, vocab, seq, embed, class_size):
    ks = jax.random.split(key, 9)
    s = 0.02
    D, F = embed, 4 * embed

    def w16(k, shape):   # matmul weights stored bf16 (MXU operands; halves HBM/VMEM traffic)
        return (s * jax.random.normal(k, shape, jnp.float32)).astype(jnp.bfloat16)

    w_cls = s * jax.random.normal(ks[7], (D, class_size), jnp.float32)
    w_cls = jnp.pad(w_cls, ((0, 0), (0, C_PAD - class_size))).astype(jnp.bfloat16)

    return dict(
        wte=s * jax.random.normal(ks[0], (vocab, D), jnp.float32),
        wpe=s * jax.random.normal(ks[1], (seq, D), jnp.float32),
        ln1_g=jnp.ones((1, D), jnp.float32), ln1_b=jnp.zeros((1, D), jnp.float32),
        wq=w16(ks[2], (D, D)), bq=jnp.zeros((1, D), jnp.float32),
        wk=w16(ks[3], (D, D)), bk=jnp.zeros((1, D), jnp.float32),
        wv=w16(ks[4], (D, D)), bv=jnp.zeros((1, D), jnp.float32),
        wproj=w16(ks[5], (D, D)), bproj=jnp.zeros((1, D), jnp.float32),
        ln2_g=jnp.ones((1, D), jnp.float32), ln2_b=jnp.zeros((1, D), jnp.float32),
        wfc=w16(ks[6], (D, F)), bfc=jnp.zeros((1, F), jnp.float32),
        wout=w16(ks[8], (F, D)), bout=jnp.zeros((1, D), jnp.float32),
        lnf_g=jnp.ones((1, D), jnp.float32), lnf_b=jnp.zeros((1, D), jnp.float32),
        w_cls=w_cls, b_cls=jnp.zeros((1, C_PAD), jnp.float32),
    )


@functools.partial(jax.jit, static_argnames=("num_classes",))
def model_forward(x, params, num_classes):
    """x: (B, S) int32 token ids -> (B, num_classes) log-probs."""
    B, S = x.shape
    # Embedding lookup (glue, plain JAX gather).
    h = params["wte"][x] + params["wpe"][jnp.arange(S)][None, :, :]          # (B, S, D)
    mask3 = (x != 0).astype(jnp.float32)[:, None, :]                         # (B, 1, S)

    # Grid-invariant causal additive mask, hoisted out of the kernel.
    row = jnp.arange(S)[:, None]
    col = jnp.arange(S)[None, :]
    causal = jnp.where(row >= col, 0.0, -1e9).astype(jnp.float32)            # (S, S)

    weights = [
        params["ln1_g"], params["ln1_b"],
        params["wq"], params["bq"], params["wk"], params["bk"], params["wv"], params["bv"],
        params["wproj"], params["bproj"],
        params["ln2_g"], params["ln2_b"],
        params["wfc"], params["bfc"], params["wout"], params["bout"],
        params["lnf_g"], params["lnf_b"],
        params["w_cls"], params["b_cls"],
    ]
    logp_pad = pplm_forward_fused(mask3, h, causal, weights, num_classes)    # (B, C_PAD)
    return logp_pad[:, :num_classes]                                         # (B, C)


if __name__ == "__main__":
    B, S, D, V, C = 2, 16, 128, 96, 4     # lane-dense D; small seq/batch/vocab/classes

    key = jax.random.PRNGKey(0)
    k_param, k_tok = jax.random.split(key)

    params = init_params(k_param, vocab=V, seq=S, embed=D, class_size=C)

    x = jax.random.randint(k_tok, (B, S), 0, V, dtype=jnp.int32)
    x = x.at[0, -3:].set(0).at[1, -5:].set(0)   # padding tokens -> exercises the (x != 0) mask

    log_probs = model_forward(x, params, num_classes=C)
    jax.block_until_ready(log_probs)

    assert log_probs.shape == (B, C)
    assert bool(jnp.all(jnp.isfinite(log_probs)))
    # rows of log_softmax must (log-)sum to ~0
    assert bool(jnp.allclose(jnp.sum(jnp.exp(log_probs), axis=-1), 1.0, atol=1e-4))

    print("KERNEL_OK")
</pallas_src>

<mosaic_0001>
module attributes {stable_mosaic.version = 11 : i64} {
  func.func @pplm_fused_kernel(%arg0: i32, %arg1: memref<1x1x16xf32, #tpu.memory_space<vmem>>, %arg2: memref<1x16x128xf32, #tpu.memory_space<vmem>>, %arg3: memref<16x16xf32, #tpu.memory_space<vmem>>, %arg4: memref<1x128xf32, #tpu.memory_space<vmem>>, %arg5: memref<1x128xf32, #tpu.memory_space<vmem>>, %arg6: memref<128x128xbf16, #tpu.memory_space<vmem>>, %arg7: memref<1x128xf32, #tpu.memory_space<vmem>>, %arg8: memref<128x128xbf16, #tpu.memory_space<vmem>>, %arg9: memref<1x128xf32, #tpu.memory_space<vmem>>, %arg10: memref<128x128xbf16, #tpu.memory_space<vmem>>, %arg11: memref<1x128xf32, #tpu.memory_space<vmem>>, %arg12: memref<128x128xbf16, #tpu.memory_space<vmem>>, %arg13: memref<1x128xf32, #tpu.memory_space<vmem>>, %arg14: memref<1x128xf32, #tpu.memory_space<vmem>>, %arg15: memref<1x128xf32, #tpu.memory_space<vmem>>, %arg16: memref<128x512xbf16, #tpu.memory_space<vmem>>, %arg17: memref<1x512xf32, #tpu.memory_space<vmem>>, %arg18: memref<512x128xbf16, #tpu.memory_space<vmem>>, %arg19: memref<1x128xf32, #tpu.memory_space<vmem>>, %arg20: memref<1x128xf32, #tpu.memory_space<vmem>>, %arg21: memref<1x128xf32, #tpu.memory_space<vmem>>, %arg22: memref<128x128xbf16, #tpu.memory_space<vmem>>, %arg23: memref<1x128xf32, #tpu.memory_space<vmem>>, %arg24: memref<1x1x128xf32, #tpu.memory_space<vmem>>) attributes {dimension_semantics = [#tpu.dimension_semantics<parallel>], iteration_bounds = array<i64: 2>, scalar_prefetch = 0 : i64, scratch_operands = 0 : i64, tpu.core_type = #tpu.core_type<tc>, window_params = [{transform_indices = @transform_0, window_bounds = array<i64: 1, 1, 16>}, {transform_indices = @transform_1, window_bounds = array<i64: 1, 16, 128>}, {pipeline_mode = #tpu.pipeline_mode<synchronous>, transform_indices = @transform_2, window_bounds = array<i64: 16, 16>}, {pipeline_mode = #tpu.pipeline_mode<synchronous>, transform_indices = @transform_3, window_bounds = array<i64: 1, 128>}, {pipeline_mode = #tpu.pipeline_mode<synchronous>, transform_indices = @transform_4, window_bounds = array<i64: 1, 128>}, {pipeline_mode = #tpu.pipeline_mode<synchronous>, transform_indices = @transform_5, window_bounds = array<i64: 128, 128>}, {pipeline_mode = #tpu.pipeline_mode<synchronous>, transform_indices = @transform_6, window_bounds = array<i64: 1, 128>}, {pipeline_mode = #tpu.pipeline_mode<synchronous>, transform_indices = @transform_7, window_bounds = array<i64: 128, 128>}, {pipeline_mode = #tpu.pipeline_mode<synchronous>, transform_indices = @transform_8, window_bounds = array<i64: 1, 128>}, {pipeline_mode = #tpu.pipeline_mode<synchronous>, transform_indices = @transform_9, window_bounds = array<i64: 128, 128>}, {pipeline_mode = #tpu.pipeline_mode<synchronous>, transform_indices = @transform_10, window_bounds = array<i64: 1, 128>}, {pipeline_mode = #tpu.pipeline_mode<synchronous>, transform_indices = @transform_11, window_bounds = array<i64: 128, 128>}, {pipeline_mode = #tpu.pipeline_mode<synchronous>, transform_indices = @transform_12, window_bounds = array<i64: 1, 128>}, {pipeline_mode = #tpu.pipeline_mode<synchronous>, transform_indices = @transform_13, window_bounds = array<i64: 1, 128>}, {pipeline_mode = #tpu.pipeline_mode<synchronous>, transform_indices = @transform_14, window_bounds = array<i64: 1, 128>}, {pipeline_mode = #tpu.pipeline_mode<synchronous>, transform_indices = @transform_15, window_bounds = array<i64: 128, 512>}, {pipeline_mode = #tpu.pipeline_mode<synchronous>, transform_indices = @transform_16, window_bounds = array<i64: 1, 512>}, {pipeline_mode = #tpu.pipeline_mode<synchronous>, transform_indices = @transform_17, window_bounds = array<i64: 512, 128>}, {pipeline_mode = #tpu.pipeline_mode<synchronous>, transform_indices = @transform_18, window_bounds = array<i64: 1, 128>}, {pipeline_mode = #tpu.pipeline_mode<synchronous>, transform_indices = @transform_19, window_bounds = array<i64: 1, 128>}, {pipeline_mode = #tpu.pipeline_mode<synchronous>, transform_indices = @transform_20, window_bounds = array<i64: 1, 128>}, {pipeline_mode = #tpu.pipeline_mode<synchronous>, transform_indices = @transform_21, window_bounds = array<i64: 128, 128>}, {pipeline_mode = #tpu.pipeline_mode<synchronous>, transform_indices = @transform_22, window_bounds = array<i64: 1, 128>}, {transform_indices = @transform_23, window_bounds = array<i64: 1, 1, 128>}]} {
    %c0 = arith.constant 0 : index
    %c0_0 = arith.constant 0 : index
    %c0_1 = arith.constant 0 : index
    %0 = vector.load %arg2[%c0, %c0_0, %c0_1] : memref<1x16x128xf32, #tpu.memory_space<vmem>>, vector<1x16x128xf32>
    %1 = vector.shape_cast %0 : vector<1x16x128xf32> to vector<16x128xf32>
    %c0_2 = arith.constant 0 : index
    %c0_3 = arith.constant 0 : index
    %2 = vector.load %arg4[%c0_2, %c0_3] : memref<1x128xf32, #tpu.memory_space<vmem>>, vector<1x128xf32>
    %c0_4 = arith.constant 0 : index
    %c0_5 = arith.constant 0 : index
    %3 = vector.load %arg5[%c0_4, %c0_5] : memref<1x128xf32, #tpu.memory_space<vmem>>, vector<1x128xf32>
    %cst = arith.constant dense<0.000000e+00> : vector<16xf32>
    %4 = vector.multi_reduction <add>, %1, %cst [1] : vector<16x128xf32> to vector<16xf32>
    %5 = vector.shape_cast %4 : vector<16xf32> to vector<16x1xf32>
    %cst_6 = arith.constant 1.280000e+02 : f32
    %6 = vector.broadcast %cst_6 : f32 to vector<16x1xf32>
    %7 = arith.divf %5, %6 : vector<16x1xf32>
    %8 = vector.broadcast %7 : vector<16x1xf32> to vector<16x128xf32>
    %9 = arith.subf %1, %8 : vector<16x128xf32>
    %10 = vector.broadcast %7 : vector<16x1xf32> to vector<16x128xf32>
    %11 = arith.subf %1, %10 : vector<16x128xf32>
    %12 = arith.mulf %9, %11 : vector<16x128xf32>
    %cst_7 = arith.constant dense<0.000000e+00> : vector<16xf32>
    %13 = vector.multi_reduction <add>, %12, %cst_7 [1] : vector<16x128xf32> to vector<16xf32>
    %14 = vector.shape_cast %13 : vector<16xf32> to vector<16x1xf32>
    %cst_8 = arith.constant 1.280000e+02 : f32
    %15 = vector.broadcast %cst_8 : f32 to vector<16x1xf32>
    %16 = arith.divf %14, %15 : vector<16x1xf32>
    %17 = vector.broadcast %7 : vector<16x1xf32> to vector<16x128xf32>
    %18 = arith.subf %1, %17 : vector<16x128xf32>
    %cst_9 = arith.constant 9.99999974E-6 : f32
    %19 = vector.broadcast %cst_9 : f32 to vector<16x1xf32>
    %20 = arith.addf %16, %19 : vector<16x1xf32>
    %21 = math.rsqrt %20 : vector<16x1xf32>
    %22 = vector.broadcast %21 : vector<16x1xf32> to vector<16x128xf32>
    %23 = arith.mulf %18, %22 : vector<16x128xf32>
    %24 = vector.broadcast %2 : vector<1x128xf32> to vector<16x128xf32>
    %25 = arith.mulf %23, %24 : vector<16x128xf32>
    %26 = vector.broadcast %3 : vector<1x128xf32> to vector<16x128xf32>
    %27 = arith.addf %25, %26 : vector<16x128xf32>
    %28 = arith.truncf %27 : vector<16x128xf32> to vector<16x128xbf16>
    %c0_10 = arith.constant 0 : index
    %c0_11 = arith.constant 0 : index
    %29 = vector.load %arg6[%c0_10, %c0_11] : memref<128x128xbf16, #tpu.memory_space<vmem>>, vector<128x128xbf16>
    %cst_12 = arith.constant dense<0.000000e+00> : vector<16x128xf32>
    %30 = tpu.matmul %28, %29, %cst_12 {dimension_numbers = #tpu.dot_dimension_numbers<[1], [0], [0], [1], [0, 0, 1, 1], [], []>} : vector<16x128xbf16>, vector<128x128xbf16>, vector<16x128xf32> -> vector<16x128xf32>
    %c0_13 = arith.constant 0 : index
    %c0_14 = arith.constant 0 : index
    %31 = vector.load %arg7[%c0_13, %c0_14] : memref<1x128xf32, #tpu.memory_space<vmem>>, vector<1x128xf32>
    %32 = vector.broadcast %31 : vector<1x128xf32> to vector<16x128xf32>
    %33 = arith.addf %30, %32 : vector<16x128xf32>
    %c0_15 = arith.constant 0 : index
    %c0_16 = arith.constant 0 : index
    %34 = vector.load %arg8[%c0_15, %c0_16] : memref<128x128xbf16, #tpu.memory_space<vmem>>, vector<128x128xbf16>
    %cst_17 = arith.constant dense<0.000000e+00> : vector<16x128xf32>
    %35 = tpu.matmul %28, %34, %cst_17 {dimension_numbers = #tpu.dot_dimension_numbers<[1], [0], [0], [1], [0, 0, 1, 1], [], []>} : vector<16x128xbf16>, vector<128x128xbf16>, vector<16x128xf32> -> vector<16x128xf32>
    %c0_18 = arith.constant 0 : index
    %c0_19 = arith.constant 0 : index
    %36 = vector.load %arg9[%c0_18, %c0_19] : memref<1x128xf32, #tpu.memory_space<vmem>>, vector<1x128xf32>
    %37 = vector.broadcast %36 : vector<1x128xf32> to vector<16x128xf32>
    %38 = arith.addf %35, %37 : vector<16x128xf32>
    %c0_20 = arith.constant 0 : index
    %c0_21 = arith.constant 0 : index
    %39 = vector.load %arg10[%c0_20, %c0_21] : memref<128x128xbf16, #tpu.memory_space<vmem>>, vector<128x128xbf16>
    %cst_22 = arith.constant dense<0.000000e+00> : vector<16x128xf32>
    %40 = tpu.matmul %28, %39, %cst_22 {dimension_numbers = #tpu.dot_dimension_numbers<[1], [0], [0], [1], [0, 0, 1, 1], [], []>} : vector<16x128xbf16>, vector<128x128xbf16>, vector<16x128xf32> -> vector<16x128xf32>
    %c0_23 = arith.constant 0 : index
    %c0_24 = arith.constant 0 : index
    %41 = vector.load %arg11[%c0_23, %c0_24] : memref<1x128xf32, #tpu.memory_space<vmem>>, vector<1x128xf32>
    %42 = vector.broadcast %41 : vector<1x128xf32> to vector<16x128xf32>
    %43 = arith.addf %40, %42 : vector<16x128xf32>
    %44 = arith.truncf %33 : vector<16x128xf32> to vector<16x128xbf16>
    %45 = arith.truncf %38 : vector<16x128xf32> to vector<16x128xbf16>
    %cst_25 = arith.constant dense<0.000000e+00> : vector<16x16xf32>
    %46 = tpu.matmul %44, %45, %cst_25 {dimension_numbers = #tpu.dot_dimension_numbers<[1], [1], [0], [0], [0, 0, 1, 0], [], []>} : vector<16x128xbf16>, vector<16x128xbf16>, vector<16x16xf32> -> vector<16x16xf32>
    %cst_26 = arith.constant 0.0883883461 : f32
    %47 = vector.broadcast %cst_26 : f32 to vector<16x16xf32>
    %48 = arith.mulf %46, %47 : vector<16x16xf32>
    %c0_27 = arith.constant 0 : index
    %c0_28 = arith.constant 0 : index
    %49 = vector.load %arg3[%c0_27, %c0_28] : memref<16x16xf32, #tpu.memory_space<vmem>>, vector<16x16xf32>
    %50 = arith.addf %48, %49 : vector<16x16xf32>
    %cst_29 = arith.constant dense<0xFF800000> : vector<16xf32>
    %51 = vector.multi_reduction <maximumf>, %50, %cst_29 [1] : vector<16x16xf32> to vector<16xf32>
    %52 = vector.shape_cast %51 : vector<16xf32> to vector<16x1xf32>
    %53 = vector.broadcast %52 : vector<16x1xf32> to vector<16x16xf32>
    %54 = arith.subf %50, %53 : vector<16x16xf32>
    %55 = math.exp %54 : vector<16x16xf32>
    %cst_30 = arith.constant dense<0.000000e+00> : vector<16xf32>
    %56 = vector.multi_reduction <add>, %55, %cst_30 [1] : vector<16x16xf32> to vector<16xf32>
    %57 = vector.shape_cast %56 : vector<16xf32> to vector<16x1xf32>
    %58 = tpu.reciprocal %57 {approx = true} : vector<16x1xf32> -> vector<16x1xf32>
    %59 = vector.broadcast %58 : vector<16x1xf32> to vector<16x16xf32>
    %60 = arith.mulf %55, %59 : vector<16x16xf32>
    %61 = arith.truncf %60 : vector<16x16xf32> to vector<16x16xbf16>
    %62 = arith.truncf %43 : vector<16x128xf32> to vector<16x128xbf16>
    %cst_31 = arith.constant dense<0.000000e+00> : vector<16x128xf32>
    %63 = tpu.matmul %61, %62, %cst_31 {dimension_numbers = #tpu.dot_dimension_numbers<[1], [0], [0], [1], [0, 0, 1, 1], [], []>} : vector<16x16xbf16>, vector<16x128xbf16>, vector<16x128xf32> -> vector<16x128xf32>
    %64 = arith.truncf %63 : vector<16x128xf32> to vector<16x128xbf16>
    %c0_32 = arith.constant 0 : index
    %c0_33 = arith.constant 0 : index
    %65 = vector.load %arg12[%c0_32, %c0_33] : memref<128x128xbf16, #tpu.memory_space<vmem>>, vector<128x128xbf16>
    %cst_34 = arith.constant dense<0.000000e+00> : vector<16x128xf32>
    %66 = tpu.matmul %64, %65, %cst_34 {dimension_numbers = #tpu.dot_dimension_numbers<[1], [0], [0], [1], [0, 0, 1, 1], [], []>} : vector<16x128xbf16>, vector<128x128xbf16>, vector<16x128xf32> -> vector<16x128xf32>
    %c0_35 = arith.constant 0 : index
    %c0_36 = arith.constant 0 : index
    %67 = vector.load %arg13[%c0_35, %c0_36] : memref<1x128xf32, #tpu.memory_space<vmem>>, vector<1x128xf32>
    %68 = vector.broadcast %67 : vector<1x128xf32> to vector<16x128xf32>
    %69 = arith.addf %66, %68 : vector<16x128xf32>
    %70 = arith.addf %1, %69 : vector<16x128xf32>
    %c0_37 = arith.constant 0 : index
    %c0_38 = arith.constant 0 : index
    %71 = vector.load %arg14[%c0_37, %c0_38] : memref<1x128xf32, #tpu.memory_space<vmem>>, vector<1x128xf32>
    %c0_39 = arith.constant 0 : index
    %c0_40 = arith.constant 0 : index
    %72 = vector.load %arg15[%c0_39, %c0_40] : memref<1x128xf32, #tpu.memory_space<vmem>>, vector<1x128xf32>
    %cst_41 = arith.constant dense<0.000000e+00> : vector<16xf32>
    %73 = vector.multi_reduction <add>, %70, %cst_41 [1] : vector<16x128xf32> to vector<16xf32>
    %74 = vector.shape_cast %73 : vector<16xf32> to vector<16x1xf32>
    %cst_42 = arith.constant 1.280000e+02 : f32
    %75 = vector.broadcast %cst_42 : f32 to vector<16x1xf32>
    %76 = arith.divf %74, %75 : vector<16x1xf32>
    %77 = vector.broadcast %76 : vector<16x1xf32> to vector<16x128xf32>
    %78 = arith.subf %70, %77 : vector<16x128xf32>
    %79 = vector.broadcast %76 : vector<16x1xf32> to vector<16x128xf32>
    %80 = arith.subf %70, %79 : vector<16x128xf32>
    %81 = arith.mulf %78, %80 : vector<16x128xf32>
    %cst_43 = arith.constant dense<0.000000e+00> : vector<16xf32>
    %82 = vector.multi_reduction <add>, %81, %cst_43 [1] : vector<16x128xf32> to vector<16xf32>
    %83 = vector.shape_cast %82 : vector<16xf32> to vector<16x1xf32>
    %cst_44 = arith.constant 1.280000e+02 : f32
    %84 = vector.broadcast %cst_44 : f32 to vector<16x1xf32>
    %85 = arith.divf %83, %84 : vector<16x1xf32>
    %86 = vector.broadcast %76 : vector<16x1xf32> to vector<16x128xf32>
    %87 = arith.subf %70, %86 : vector<16x128xf32>
    %cst_45 = arith.constant 9.99999974E-6 : f32
    %88 = vector.broadcast %cst_45 : f32 to vector<16x1xf32>
    %89 = arith.addf %85, %88 : vector<16x1xf32>
    %90 = math.rsqrt %89 : vector<16x1xf32>
    %91 = vector.broadcast %90 : vector<16x1xf32> to vector<16x128xf32>
    %92 = arith.mulf %87, %91 : vector<16x128xf32>
    %93 = vector.broadcast %71 : vector<1x128xf32> to vector<16x128xf32>
    %94 = arith.mulf %92, %93 : vector<16x128xf32>
    %95 = vector.broadcast %72 : vector<1x128xf32> to vector<16x128xf32>
    %96 = arith.addf %94, %95 : vector<16x128xf32>
    %97 = arith.truncf %96 : vector<16x128xf32> to vector<16x128xbf16>
    %c0_46 = arith.constant 0 : index
    %c0_47 = arith.constant 0 : index
    %98 = vector.load %arg16[%c0_46, %c0_47] : memref<128x512xbf16, #tpu.memory_space<vmem>>, vector<128x512xbf16>
    %cst_48 = arith.constant dense<0.000000e+00> : vector<16x512xf32>
    %99 = tpu.matmul %97, %98, %cst_48 {dimension_numbers = #tpu.dot_dimension_numbers<[1], [0], [0], [1], [0, 0, 1, 1], [], []>} : vector<16x128xbf16>, vector<128x512xbf16>, vector<16x512xf32> -> vector<16x512xf32>
    %c0_49 = arith.constant 0 : index
    %c0_50 = arith.constant 0 : index
    %100 = vector.load %arg17[%c0_49, %c0_50] : memref<1x512xf32, #tpu.memory_space<vmem>>, vector<1x512xf32>
    %101 = vector.broadcast %100 : vector<1x512xf32> to vector<16x512xf32>
    %102 = arith.addf %99, %101 : vector<16x512xf32>
    %103 = arith.mulf %102, %102 : vector<16x512xf32>
    %104 = arith.mulf %102, %103 : vector<16x512xf32>
    %cst_51 = arith.constant 4.471500e-02 : f32
    %105 = vector.broadcast %cst_51 : f32 to vector<16x512xf32>
    %106 = arith.mulf %105, %104 : vector<16x512xf32>
    %107 = arith.addf %102, %106 : vector<16x512xf32>
    %cst_52 = arith.constant 0.797884583 : f32
    %108 = vector.broadcast %cst_52 : f32 to vector<16x512xf32>
    %109 = arith.mulf %108, %107 : vector<16x512xf32>
    %110 = math.tanh %109 : vector<16x512xf32>
    %cst_53 = arith.constant 1.000000e+00 : f32
    %111 = vector.broadcast %cst_53 : f32 to vector<16x512xf32>
    %112 = arith.addf %111, %110 : vector<16x512xf32>
    %cst_54 = arith.constant 5.000000e-01 : f32
    %113 = vector.broadcast %cst_54 : f32 to vector<16x512xf32>
    %114 = arith.mulf %113, %112 : vector<16x512xf32>
    %115 = arith.mulf %102, %114 : vector<16x512xf32>
    %116 = arith.truncf %115 : vector<16x512xf32> to vector<16x512xbf16>
    %c0_55 = arith.constant 0 : index
    %c0_56 = arith.constant 0 : index
    %117 = vector.load %arg18[%c0_55, %c0_56] : memref<512x128xbf16, #tpu.memory_space<vmem>>, vector<512x128xbf16>
    %cst_57 = arith.constant dense<0.000000e+00> : vector<16x128xf32>
    %118 = tpu.matmul %116, %117, %cst_57 {dimension_numbers = #tpu.dot_dimension_numbers<[1], [0], [0], [1], [0, 0, 1, 1], [], []>} : vector<16x512xbf16>, vector<512x128xbf16>, vector<16x128xf32> -> vector<16x128xf32>
    %c0_58 = arith.constant 0 : index
    %c0_59 = arith.constant 0 : index
    %119 = vector.load %arg19[%c0_58, %c0_59] : memref<1x128xf32, #tpu.memory_space<vmem>>, vector<1x128xf32>
    %120 = vector.broadcast %119 : vector<1x128xf32> to vector<16x128xf32>
    %121 = arith.addf %118, %120 : vector<16x128xf32>
    %122 = arith.addf %70, %121 : vector<16x128xf32>
    %c0_60 = arith.constant 0 : index
    %c0_61 = arith.constant 0 : index
    %123 = vector.load %arg20[%c0_60, %c0_61] : memref<1x128xf32, #tpu.memory_space<vmem>>, vector<1x128xf32>
    %c0_62 = arith.constant 0 : index
    %c0_63 = arith.constant 0 : index
    %124 = vector.load %arg21[%c0_62, %c0_63] : memref<1x128xf32, #tpu.memory_space<vmem>>, vector<1x128xf32>
    %cst_64 = arith.constant dense<0.000000e+00> : vector<16xf32>
    %125 = vector.multi_reduction <add>, %122, %cst_64 [1] : vector<16x128xf32> to vector<16xf32>
    %126 = vector.shape_cast %125 : vector<16xf32> to vector<16x1xf32>
    %cst_65 = arith.constant 1.280000e+02 : f32
    %127 = vector.broadcast %cst_65 : f32 to vector<16x1xf32>
    %128 = arith.divf %126, %127 : vector<16x1xf32>
    %129 = vector.broadcast %128 : vector<16x1xf32> to vector<16x128xf32>
    %130 = arith.subf %122, %129 : vector<16x128xf32>
    %131 = vector.broadcast %128 : vector<16x1xf32> to vector<16x128xf32>
    %132 = arith.subf %122, %131 : vector<16x128xf32>
    %133 = arith.mulf %130, %132 : vector<16x128xf32>
    %cst_66 = arith.constant dense<0.000000e+00> : vector<16xf32>
    %134 = vector.multi_reduction <add>, %133, %cst_66 [1] : vector<16x128xf32> to vector<16xf32>
    %135 = vector.shape_cast %134 : vector<16xf32> to vector<16x1xf32>
    %cst_67 = arith.constant 1.280000e+02 : f32
    %136 = vector.broadcast %cst_67 : f32 to vector<16x1xf32>
    %137 = arith.divf %135, %136 : vector<16x1xf32>
    %138 = vector.broadcast %128 : vector<16x1xf32> to vector<16x128xf32>
    %139 = arith.subf %122, %138 : vector<16x128xf32>
    %cst_68 = arith.constant 9.99999974E-6 : f32
    %140 = vector.broadcast %cst_68 : f32 to vector<16x1xf32>
    %141 = arith.addf %137, %140 : vector<16x1xf32>
    %142 = math.rsqrt %141 : vector<16x1xf32>
    %143 = vector.broadcast %142 : vector<16x1xf32> to vector<16x128xf32>
    %144 = arith.mulf %139, %143 : vector<16x128xf32>
    %145 = vector.broadcast %123 : vector<1x128xf32> to vector<16x128xf32>
    %146 = arith.mulf %144, %145 : vector<16x128xf32>
    %147 = vector.broadcast %124 : vector<1x128xf32> to vector<16x128xf32>
    %148 = arith.addf %146, %147 : vector<16x128xf32>
    %c0_69 = arith.constant 0 : index
    %c0_70 = arith.constant 0 : index
    %c0_71 = arith.constant 0 : index
    %149 = vector.load %arg1[%c0_69, %c0_70, %c0_71] : memref<1x1x16xf32, #tpu.memory_space<vmem>>, vector<1x1x16xf32>
    %150 = vector.shape_cast %149 : vector<1x1x16xf32> to vector<1x16xf32>
    %cst_72 = arith.constant dense<0.000000e+00> : vector<1x128xf32>
    %151 = tpu.matmul %150, %148, %cst_72 {dimension_numbers = #tpu.dot_dimension_numbers<[1], [0], [0], [1], [0, 0, 1, 1], [], []>} : vector<1x16xf32>, vector<16x128xf32>, vector<1x128xf32> -> vector<1x128xf32>
    %152 = vector.shape_cast %150 : vector<1x16xf32> to vector<1x1x16xf32>
    %cst_73 = arith.constant dense<0.000000e+00> : vector<1xf32>
    %153 = vector.multi_reduction <add>, %152, %cst_73 [1, 2] : vector<1x1x16xf32> to vector<1xf32>
    %154 = vector.shape_cast %153 : vector<1xf32> to vector<1x1x1xf32>
    %155 = vector.extract %154[0, 0, 0] : f32 from vector<1x1x1xf32>
    %cst_74 = arith.constant 1.000000e-10 : f32
    %156 = arith.addf %155, %cst_74 : f32
    %157 = vector.broadcast %156 : f32 to vector<1x128xf32>
    %158 = arith.divf %151, %157 : vector<1x128xf32>
    %159 = arith.truncf %158 : vector<1x128xf32> to vector<1x128xbf16>
    %c0_75 = arith.constant 0 : index
    %c0_76 = arith.constant 0 : index
    %160 = vector.load %arg22[%c0_75, %c0_76] : memref<128x128xbf16, #tpu.memory_space<vmem>>, vector<128x128xbf16>
    %cst_77 = arith.constant dense<0.000000e+00> : vector<1x128xf32>
    %161 = tpu.matmul %159, %160, %cst_77 {dimension_numbers = #tpu.dot_dimension_numbers<[1], [0], [0], [1], [0, 0, 1, 1], [], []>} : vector<1x128xbf16>, vector<128x128xbf16>, vector<1x128xf32> -> vector<1x128xf32>
    %c0_78 = arith.constant 0 : index
    %c0_79 = arith.constant 0 : index
    %162 = vector.load %arg23[%c0_78, %c0_79] : memref<1x128xf32, #tpu.memory_space<vmem>>, vector<1x128xf32>
    %163 = arith.addf %161, %162 : vector<1x128xf32>
    %164 = tpu.iota {dimensions = array<i32: 1>} : vector<1x128xi32>
    %c4_i32 = arith.constant 4 : i32
    %165 = vector.broadcast %c4_i32 : i32 to vector<1x128xi32>
    %166 = arith.cmpi slt, %164, %165 : vector<1x128xi32>
    %cst_80 = arith.constant -1.000000e+30 : f32
    %167 = vector.broadcast %cst_80 : f32 to vector<1x128xf32>
    %168 = arith.select %166, %163, %167 : vector<1x128xi1>, vector<1x128xf32>
    %cst_81 = arith.constant dense<0xFF800000> : vector<1xf32>
    %169 = vector.multi_reduction <maximumf>, %168, %cst_81 [1] : vector<1x128xf32> to vector<1xf32>
    %170 = vector.shape_cast %169 : vector<1xf32> to vector<1x1xf32>
    %171 = vector.broadcast %170 : vector<1x1xf32> to vector<1x128xf32>
    %172 = arith.subf %168, %171 : vector<1x128xf32>
    %173 = math.exp %172 : vector<1x128xf32>
    %cst_82 = arith.constant dense<0.000000e+00> : vector<1xf32>
    %174 = vector.multi_reduction <add>, %173, %cst_82 [1] : vector<1x128xf32> to vector<1xf32>
    %175 = vector.shape_cast %174 : vector<1xf32> to vector<1x1xf32>
    %176 = math.log %175 : vector<1x1xf32>
    %177 = vector.broadcast %176 : vector<1x1xf32> to vector<1x128xf32>
    %178 = arith.subf %172, %177 : vector<1x128xf32>
    %c0_83 = arith.constant 0 : index
    %c0_84 = arith.constant 0 : index
    %c0_85 = arith.constant 0 : index
    %179 = vector.load %arg24[%c0_83, %c0_84, %c0_85] : memref<1x1x128xf32, #tpu.memory_space<vmem>>, vector<1x1x128xf32>
    %180 = vector.shape_cast %179 : vector<1x1x128xf32> to vector<1x128xf32>
    %181 = vector.shape_cast %178 : vector<1x128xf32> to vector<1x1x128xf32>
    tpu.vector_store %arg24[%c0_83, %c0_84, %c0_85], %181 {strides = array<i32>} : memref<1x1x128xf32, #tpu.memory_space<vmem>>, vector<1x1x128xf32>,
    return
  }
  func.func @transform_0(%arg0: i32) -> (i32, i32, i32) {
    %c0_i32 = arith.constant 0 : i32
    %c0_i32_0 = arith.constant 0 : i32
    %c0_i32_1 = arith.constant 0 : i32
    return %arg0, %c0_i32, %c0_i32_0 : i32, i32, i32
  }
  func.func @transform_1(%arg0: i32) -> (i32, i32, i32) {
    %c0_i32 = arith.constant 0 : i32
    %c0_i32_0 = arith.constant 0 : i32
    %c0_i32_1 = arith.constant 0 : i32
    return %arg0, %c0_i32, %c0_i32_0 : i32, i32, i32
  }
  func.func @transform_2(%arg0: i32) -> (i32, i32) {
    %c0_i32 = arith.constant 0 : i32
    %c0_i32_0 = arith.constant 0 : i32
    %c0_i32_1 = arith.constant 0 : i32
    return %c0_i32, %c0_i32_0 : i32, i32
  }
  func.func @transform_3(%arg0: i32) -> (i32, i32) {
    %c0_i32 = arith.constant 0 : i32
    %c0_i32_0 = arith.constant 0 : i32
    %c0_i32_1 = arith.constant 0 : i32
    return %c0_i32, %c0_i32_0 : i32, i32
  }
  func.func @transform_4(%arg0: i32) -> (i32, i32) {
    %c0_i32 = arith.constant 0 : i32
    %c0_i32_0 = arith.constant 0 : i32
    %c0_i32_1 = arith.constant 0 : i32
    return %c0_i32, %c0_i32_0 : i32, i32
  }
  func.func @transform_5(%arg0: i32) -> (i32, i32) {
    %c0_i32 = arith.constant 0 : i32
    %c0_i32_0 = arith.constant 0 : i32
    %c0_i32_1 = arith.constant 0 : i32
    return %c0_i32, %c0_i32_0 : i32, i32
  }
  func.func @transform_6(%arg0: i32) -> (i32, i32) {
    %c0_i32 = arith.constant 0 : i32
    %c0_i32_0 = arith.constant 0 : i32
    %c0_i32_1 = arith.constant 0 : i32
    return %c0_i32, %c0_i32_0 : i32, i32
  }
  func.func @transform_7(%arg0: i32) -> (i32, i32) {
    %c0_i32 = arith.constant 0 : i32
    %c0_i32_0 = arith.constant 0 : i32
    %c0_i32_1 = arith.constant 0 : i32
    return %c0_i32, %c0_i32_0 : i32, i32
  }
  func.func @transform_8(%arg0: i32) -> (i32, i32) {
    %c0_i32 = arith.constant 0 : i32
    %c0_i32_0 = arith.constant 0 : i32
    %c0_i32_1 = arith.constant 0 : i32
    return %c0_i32, %c0_i32_0 : i32, i32
  }
  func.func @transform_9(%arg0: i32) -> (i32, i32) {
    %c0_i32 = arith.constant 0 : i32
    %c0_i32_0 = arith.constant 0 : i32
    %c0_i32_1 = arith.constant 0 : i32
    return %c0_i32, %c0_i32_0 : i32, i32
  }
  func.func @transform_10(%arg0: i32) -> (i32, i32) {
    %c0_i32 = arith.constant 0 : i32
    %c0_i32_0 = arith.constant 0 : i32
    %c0_i32_1 = arith.constant 0 : i32
    return %c0_i32, %c0_i32_0 : i32, i32
  }
  func.func @transform_11(%arg0: i32) -> (i32, i32) {
    %c0_i32 = arith.constant 0 : i32
    %c0_i32_0 = arith.constant 0 : i32
    %c0_i32_1 = arith.constant 0 : i32
    return %c0_i32, %c0_i32_0 : i32, i32
  }
  func.func @transform_12(%arg0: i32) -> (i32, i32) {
    %c0_i32 = arith.constant 0 : i32
    %c0_i32_0 = arith.constant 0 : i32
    %c0_i32_1 = arith.constant 0 : i32
    return %c0_i32, %c0_i32_0 : i32, i32
  }
  func.func @transform_13(%arg0: i32) -> (i32, i32) {
    %c0_i32 = arith.constant 0 : i32
    %c0_i32_0 = arith.constant 0 : i32
    %c0_i32_1 = arith.constant 0 : i32
    return %c0_i32, %c0_i32_0 : i32, i32
  }
  func.func @transform_14(%arg0: i32) -> (i32, i32) {
    %c0_i32 = arith.constant 0 : i32
    %c0_i32_0 = arith.constant 0 : i32
    %c0_i32_1 = arith.constant 0 : i32
    return %c0_i32, %c0_i32_0 : i32, i32
  }
  func.func @transform_15(%arg0: i32) -> (i32, i32) {
    %c0_i32 = arith.constant 0 : i32
    %c0_i32_0 = arith.constant 0 : i32
    %c0_i32_1 = arith.constant 0 : i32
    return %c0_i32, %c0_i32_0 : i32, i32
  }
  func.func @transform_16(%arg0: i32) -> (i32, i32) {
    %c0_i32 = arith.constant 0 : i32
    %c0_i32_0 = arith.constant 0 : i32
    %c0_i32_1 = arith.constant 0 : i32
    return %c0_i32, %c0_i32_0 : i32, i32
  }
  func.func @transform_17(%arg0: i32) -> (i32, i32) {
    %c0_i32 = arith.constant 0 : i32
    %c0_i32_0 = arith.constant 0 : i32
    %c0_i32_1 = arith.constant 0 : i32
    return %c0_i32, %c0_i32_0 : i32, i32
  }
  func.func @transform_18(%arg0: i32) -> (i32, i32) {
    %c0_i32 = arith.constant 0 : i32
    %c0_i32_0 = arith.constant 0 : i32
    %c0_i32_1 = arith.constant 0 : i32
    return %c0_i32, %c0_i32_0 : i32, i32
  }
  func.func @transform_19(%arg0: i32) -> (i32, i32) {
    %c0_i32 = arith.constant 0 : i32
    %c0_i32_0 = arith.constant 0 : i32
    %c0_i32_1 = arith.constant 0 : i32
    return %c0_i32, %c0_i32_0 : i32, i32
  }
  func.func @transform_20(%arg0: i32) -> (i32, i32) {
    %c0_i32 = arith.constant 0 : i32
    %c0_i32_0 = arith.constant 0 : i32
    %c0_i32_1 = arith.constant 0 : i32
    return %c0_i32, %c0_i32_0 : i32, i32
  }
  func.func @transform_21(%arg0: i32) -> (i32, i32) {
    %c0_i32 = arith.constant 0 : i32
    %c0_i32_0 = arith.constant 0 : i32
    %c0_i32_1 = arith.constant 0 : i32
    return %c0_i32, %c0_i32_0 : i32, i32
  }
  func.func @transform_22(%arg0: i32) -> (i32, i32) {
    %c0_i32 = arith.constant 0 : i32
    %c0_i32_0 = arith.constant 0 : i32
    %c0_i32_1 = arith.constant 0 : i32
    return %c0_i32, %c0_i32_0 : i32, i32
  }
  func.func @transform_23(%arg0: i32) -> (i32, i32, i32) {
    %c0_i32 = arith.constant 0 : i32
    %c0_i32_0 = arith.constant 0 : i32
    %c0_i32_1 = arith.constant 0 : i32
    return %arg0, %c0_i32, %c0_i32_0 : i32, i32, i32
  }
}

</mosaic_0001>

<llo_original>
// kernel: model_forward.1
$region0: #{model_forward.1}
  #allocation0 [shape = 'u32[]', space=smem, size = 0x4, offset = 0x4, fixed_abs, tag = 'smem constant byte address 0x4 - core index']
  #allocation1 [shape = 'u32[144,128]{1,0:T(1,128)}', space=vmem, size = 0x12000, scoped, tag = 'internal scratch']
  %s0 = inlined_call_operand.vmem [shape: f32[2,1,16], index: 0, kind: input, shape index: {}]
  %s1 = inlined_call_operand.vmem [shape: f32[2,16,128], index: 1, kind: input, shape index: {}]
  %s2 = inlined_call_operand.vmem [shape: f32[16,16], index: 2, kind: input, shape index: {}]
  %s3 = inlined_call_operand.vmem [shape: f32[1,128], index: 3, kind: input, shape index: {}]
  %s4 = inlined_call_operand.vmem [shape: f32[1,128], index: 4, kind: input, shape index: {}]
  %s5 = inlined_call_operand.vmem [shape: bf16[128,128], index: 5, kind: input, shape index: {}]
  %s6 = inlined_call_operand.vmem [shape: f32[1,128], index: 6, kind: input, shape index: {}]
  %s7 = inlined_call_operand.vmem [shape: bf16[128,128], index: 7, kind: input, shape index: {}]
  %s8 = inlined_call_operand.vmem [shape: f32[1,128], index: 8, kind: input, shape index: {}]
  %s9 = inlined_call_operand.vmem [shape: bf16[128,128], index: 9, kind: input, shape index: {}]
  %s10 = inlined_call_operand.vmem [shape: f32[1,128], index: 10, kind: input, shape index: {}]
  %s11 = inlined_call_operand.hbm [shape: bf16[128,128], index: 11, kind: input, shape index: {}]
  %s12 = inlined_call_operand.vmem [shape: f32[1,128], index: 12, kind: input, shape index: {}]
  %s13 = inlined_call_operand.vmem [shape: f32[1,128], index: 13, kind: input, shape index: {}]
  %s14 = inlined_call_operand.vmem [shape: f32[1,128], index: 14, kind: input, shape index: {}]
  %s15 = inlined_call_operand.vmem [shape: bf16[128,512], index: 15, kind: input, shape index: {}]
  %s16 = inlined_call_operand.vmem [shape: f32[1,512], index: 16, kind: input, shape index: {}]
  %s17 = inlined_call_operand.hbm [shape: bf16[512,128], index: 17, kind: input, shape index: {}]
  %s18 = inlined_call_operand.vmem [shape: f32[1,128], index: 18, kind: input, shape index: {}]
  %s19 = inlined_call_operand.vmem [shape: f32[1,128], index: 19, kind: input, shape index: {}]
  %s20 = inlined_call_operand.vmem [shape: f32[1,128], index: 20, kind: input, shape index: {}]
  %s21 = inlined_call_operand.vmem [shape: bf16[128,128], index: 21, kind: input, shape index: {}]
  %s22 = inlined_call_operand.vmem [shape: f32[1,128], index: 22, kind: input, shape index: {}]
  %s23 = inlined_call_operand.hbm [shape: f32[2,1,128], index: 23, kind: output, shape index: {}]
  %s24 = sld [smem:[#allocation0]]
  $region133: #{model_forward.1} parent=0
    _
  %s26 = ssub.s32 1, %s24
  %s27 = scalar_select 0, %s26, %s24
  $region1: #{model_forward.1} parent=0
    #allocation2 [shape = 'u8[32768]{0}', space=vmem, size = 0x8000, scoped, tag = 'input window, operand 11, single buffered']
    #allocation3 [shape = 's32[2]{0}', space=sflag, size = 0x8, scoped, tag = 'scoped memory for model_forward.1']
    #allocation4 [shape = 's32[2]{0}', space=sflag, size = 0x8, scoped, tag = 'scoped memory for model_forward.1']
    #allocation5 [shape = 'u8[131072]{0}', space=vmem, size = 0x20000, scoped, tag = 'input window, operand 17, single buffered']
    #allocation6 [shape = 's32[1]{0}', space=sflag, size = 0x4, scoped, tag = 'scoped memory for model_forward.1']
    #allocation7 [shape = 'u8[1024]{0}', space=vmem, size = 0x400, scoped, tag = 'output window, operand 0']
    %28 = vsyncpa [#allocation3], 0
    %29 = vsyncpa [#allocation6], 0
    %30 = vsyncpa [#allocation4], 0
    %s31 = scalar_lea.sflag [#allocation4], 1
    %32 = vsyncpa %s31, 0
    loop: start=0, step=1, limit=4
    $region2: #{model_forward.1} parent=1 // loop_pre_header
      _
    $region3: #{model_forward.1} parent=1 // loop_header
      %s34 = sphi 0, %s38
      %p35 = scmp.ge.s32.totalorder %s34, 4
      %s44 = sphi 0, %s46
      %s47 = sphi 0, %s44
      %s48 = sphi 0, %s47
      %s64 = sphi 0, %s48
      %s70 = sphi 0, %s72
      %s73 = sphi 0, %s70
      %s74 = sphi 0, %s73
      %s90 = sphi 0, %s74
      %s94 = sphi 0, %s94
      %s96 = sphi 0, %s94
      %s97 = sphi 0, %s96
      %s111 = sphi 0, %s97
      %s115 = sphi 0, %s115
      %s117 = sphi 0, %s115
      %s118 = sphi 0, %s117
      %s132 = sphi 0, %s118
      %s136 = sphi 0, %s136
      %s138 = sphi 0, %s136
      %s139 = sphi 0, %s138
      %s153 = sphi 0, %s139
      %s157 = sphi 0, %s157
      %s159 = sphi 0, %s157
      %s160 = sphi 0, %s159
      %s174 = sphi 0, %s160
      %s178 = sphi 0, %s178
      %s180 = sphi 0, %s178
      %s181 = sphi 0, %s180
      %s195 = sphi 0, %s181
      %s199 = sphi 0, %s199
      %s201 = sphi 0, %s199
      %s202 = sphi 0, %s201
      %s216 = sphi 0, %s202
      %s220 = sphi 0, %s220
      %s222 = sphi 0, %s220
      %s223 = sphi 0, %s222
      %s237 = sphi 0, %s223
      %s241 = sphi 0, %s241
      %s243 = sphi 0, %s241
      %s244 = sphi 0, %s243
      %s258 = sphi 0, %s244
      %s262 = sphi 0, %s262
      %s264 = sphi 0, %s262
      %s265 = sphi 0, %s264
      %s279 = sphi 0, %s265
      %s283 = sphi 0, %s283
      %s285 = sphi 0, %s283
      %s286 = sphi 0, %s285
      %s300 = sphi 0, %s286
      %s304 = sphi 0, %s304
      %s306 = sphi 0, %s304
      %s307 = sphi 0, %s306
      %s321 = sphi 0, %s307
      %s325 = sphi 0, %s325
      %s327 = sphi 0, %s325
      %s328 = sphi 0, %s327
      %s342 = sphi 0, %s328
      %s346 = sphi 0, %s346
      %s348 = sphi 0, %s346
      %s349 = sphi 0, %s348
      %s363 = sphi 0, %s349
      %s367 = sphi 0, %s367
      %s369 = sphi 0, %s367
      %s370 = sphi 0, %s369
      %s384 = sphi 0, %s370
      %s388 = sphi 0, %s388
      %s390 = sphi 0, %s388
      %s391 = sphi 0, %s390
      %s405 = sphi 0, %s391
      %s409 = sphi 0, %s409
      %s411 = sphi 0, %s409
      %s412 = sphi 0, %s411
      %s426 = sphi 0, %s412
      %s430 = sphi 0, %s430
      %s432 = sphi 0, %s430
      %s433 = sphi 0, %s432
      %s447 = sphi 0, %s433
      %s451 = sphi 0, %s451
      %s453 = sphi 0, %s451
      %s454 = sphi 0, %s453
      %s468 = sphi 0, %s454
      %s472 = sphi 0, %s472
      %s474 = sphi 0, %s472
      %s475 = sphi 0, %s474
      %s489 = sphi 0, %s475
      %s493 = sphi 0, %s493
      %s495 = sphi 0, %s493
      %s496 = sphi 0, %s495
      %s510 = sphi 0, %s496
      %s514 = sphi 0, %s514
      %s516 = sphi 0, %s514
      %s517 = sphi 0, %s516
      %s531 = sphi 0, %s517
      %s537 = sphi 0, %s539
      %s540 = sphi 0, %s537
      %s541 = sphi 0, %s540
      %s557 = sphi 0, %s541
    $region4: #{model_forward.1} parent=1 // loop_header_branch
      %37 = sbr.rel (%p35) target = $region8
    $region5: #{model_forward.1} parent=1 // loop_body
      %s39 = ssub.s32 %s34, 1
      %s40 = ssub.s32 %s34, 2
      %s41 = sadd.s32 %s34, 1
      %s42 = ssub.s32 %s34, %s41
      %p43 = scmp.eq.s32.totalorder %s42, 0
      %s45 = sadd.s32 %s44, 1
      %s46 = scalar_select %p43, %s44, %s45
      %p49 = pneg %p43
      %p50 = scmp.eq.s32.totalorder %s34, 1
      %p51 = por %p49, %p50
      %p52 = scmp.ne.s32.totalorder %s44, %s47
      %p53 = scmp.eq.s32.totalorder %s34, 0
      %p54 = por %p52, %p53
      %p55 = scmp.ne.s32.totalorder %s44, %s47
      %p56 = scmp.eq.s32.totalorder %s39, 1
      %p57 = por %p55, %p56
      %p58 = scmp.ne.s32.totalorder %s47, %s48
      %p59 = scmp.eq.s32.totalorder %s39, 0
      %p60 = por %p58, %p59
      %p61 = scmp.ne.s32.totalorder %s47, %s48
      %p62 = scmp.eq.s32.totalorder %s40, 1
      %p63 = por %p61, %p62
      %p65 = scmp.ne.s32.totalorder %s48, %s64
      %p66 = scmp.eq.s32.totalorder %s40, 0
      %p67 = por %p65, %p66
      %s68 = ssub.s32 %s34, %s41
      %p69 = scmp.eq.s32.totalorder %s68, 0
      %s71 = sadd.s32 %s70, 1
      %s72 = scalar_select %p69, %s70, %s71
      %p75 = pneg %p69
      %p76 = scmp.eq.s32.totalorder %s34, 1
      %p77 = por %p75, %p76
      %p78 = scmp.ne.s32.totalorder %s70, %s73
      %p79 = scmp.eq.s32.totalorder %s34, 0
      %p80 = por %p78, %p79
      %p81 = scmp.ne.s32.totalorder %s70, %s73
      %p82 = scmp.eq.s32.totalorder %s39, 1
      %p83 = por %p81, %p82
      %p84 = scmp.ne.s32.totalorder %s73, %s74
      %p85 = scmp.eq.s32.totalorder %s39, 0
      %p86 = por %p84, %p85
      %p87 = scmp.ne.s32.totalorder %s73, %s74
      %p88 = scmp.eq.s32.totalorder %s40, 1
      %p89 = por %p87, %p88
      %p91 = scmp.ne.s32.totalorder %s74, %s90
      %p92 = scmp.eq.s32.totalorder %s40, 0
      %p93 = por %p91, %p92
      %s95 = sadd.s32 %s94, 1
      %p98 = scmp.eq.s32.totalorder %s34, 1
      %p99 = scmp.ne.s32.totalorder %s94, %s96
      %p100 = scmp.eq.s32.totalorder %s34, 0
      %p101 = por %p99, %p100
      %p102 = scmp.ne.s32.totalorder %s94, %s96
      %p103 = scmp.eq.s32.totalorder %s39, 1
      %p104 = por %p102, %p103
      %p105 = scmp.ne.s32.totalorder %s96, %s97
      %p106 = scmp.eq.s32.totalorder %s39, 0
      %p107 = por %p105, %p106
      %p108 = scmp.ne.s32.totalorder %s96, %s97
      %p109 = scmp.eq.s32.totalorder %s40, 1
      %p110 = por %p108, %p109
      %p112 = scmp.ne.s32.totalorder %s97, %s111
      %p113 = scmp.eq.s32.totalorder %s40, 0
      %p114 = por %p112, %p113
      %s116 = sadd.s32 %s115, 1
      %p119 = scmp.eq.s32.totalorder %s34, 1
      %p120 = scmp.ne.s32.totalorder %s115, %s117
      %p121 = scmp.eq.s32.totalorder %s34, 0
      %p122 = por %p120, %p121
      %p123 = scmp.ne.s32.totalorder %s115, %s117
      %p124 = scmp.eq.s32.totalorder %s39, 1
      %p125 = por %p123, %p124
      %p126 = scmp.ne.s32.totalorder %s117, %s118
      %p127 = scmp.eq.s32.totalorder %s39, 0
      %p128 = por %p126, %p127
      %p129 = scmp.ne.s32.totalorder %s117, %s118
      %p130 = scmp.eq.s32.totalorder %s40, 1
      %p131 = por %p129, %p130
      %p133 = scmp.ne.s32.totalorder %s118, %s132
      %p134 = scmp.eq.s32.totalorder %s40, 0
      %p135 = por %p133, %p134
      %s137 = sadd.s32 %s136, 1
      %p140 = scmp.eq.s32.totalorder %s34, 1
      %p141 = scmp.ne.s32.totalorder %s136, %s138
      %p142 = scmp.eq.s32.totalorder %s34, 0
      %p143 = por %p141, %p142
      %p144 = scmp.ne.s32.totalorder %s136, %s138
      %p145 = scmp.eq.s32.totalorder %s39, 1
      %p146 = por %p144, %p145
      %p147 = scmp.ne.s32.totalorder %s138, %s139
      %p148 = scmp.eq.s32.totalorder %s39, 0
      %p149 = por %p147, %p148
      %p150 = scmp.ne.s32.totalorder %s138, %s139
      %p151 = scmp.eq.s32.totalorder %s40, 1
      %p152 = por %p150, %p151
      %p154 = scmp.ne.s32.totalorder %s139, %s153
      %p155 = scmp.eq.s32.totalorder %s40, 0
      %p156 = por %p154, %p155
      %s158 = sadd.s32 %s157, 1
      %p161 = scmp.eq.s32.totalorder %s34, 1
      %p162 = scmp.ne.s32.totalorder %s157, %s159
      %p163 = scmp.eq.s32.totalorder %s34, 0
      %p164 = por %p162, %p163
      %p165 = scmp.ne.s32.totalorder %s157, %s159
      %p166 = scmp.eq.s32.totalorder %s39, 1
      %p167 = por %p165, %p166
      %p168 = scmp.ne.s32.totalorder %s159, %s160
      %p169 = scmp.eq.s32.totalorder %s39, 0
      %p170 = por %p168, %p169
      %p171 = scmp.ne.s32.totalorder %s159, %s160
      %p172 = scmp.eq.s32.totalorder %s40, 1
      %p173 = por %p171, %p172
      %p175 = scmp.ne.s32.totalorder %s160, %s174
      %p176 = scmp.eq.s32.totalorder %s40, 0
      %p177 = por %p175, %p176
      %s179 = sadd.s32 %s178, 1
      %p182 = scmp.eq.s32.totalorder %s34, 1
      %p183 = scmp.ne.s32.totalorder %s178, %s180
      %p184 = scmp.eq.s32.totalorder %s34, 0
      %p185 = por %p183, %p184
      %p186 = scmp.ne.s32.totalorder %s178, %s180
      %p187 = scmp.eq.s32.totalorder %s39, 1
      %p188 = por %p186, %p187
      %p189 = scmp.ne.s32.totalorder %s180, %s181
      %p190 = scmp.eq.s32.totalorder %s39, 0
      %p191 = por %p189, %p190
      %p192 = scmp.ne.s32.totalorder %s180, %s181
      %p193 = scmp.eq.s32.totalorder %s40, 1
      %p194 = por %p192, %p193
      %p196 = scmp.ne.s32.totalorder %s181, %s195
      %p197 = scmp.eq.s32.totalorder %s40, 0
      %p198 = por %p196, %p197
      %s200 = sadd.s32 %s199, 1
      %p203 = scmp.eq.s32.totalorder %s34, 1
      %p204 = scmp.ne.s32.totalorder %s199, %s201
      %p205 = scmp.eq.s32.totalorder %s34, 0
      %p206 = por %p204, %p205
      %p207 = scmp.ne.s32.totalorder %s199, %s201
      %p208 = scmp.eq.s32.totalorder %s39, 1
      %p209 = por %p207, %p208
      %p210 = scmp.ne.s32.totalorder %s201, %s202
      %p211 = scmp.eq.s32.totalorder %s39, 0
      %p212 = por %p210, %p211
      %p213 = scmp.ne.s32.totalorder %s201, %s202
      %p214 = scmp.eq.s32.totalorder %s40, 1
      %p215 = por %p213, %p214
      %p217 = scmp.ne.s32.totalorder %s202, %s216
      %p218 = scmp.eq.s32.totalorder %s40, 0
      %p219 = por %p217, %p218
      %s221 = sadd.s32 %s220, 1
      %p224 = scmp.eq.s32.totalorder %s34, 1
      %p225 = scmp.ne.s32.totalorder %s220, %s222
      %p226 = scmp.eq.s32.totalorder %s34, 0
      %p227 = por %p225, %p226
      %p228 = scmp.ne.s32.totalorder %s220, %s222
      %p229 = scmp.eq.s32.totalorder %s39, 1
      %p230 = por %p228, %p229
      %p231 = scmp.ne.s32.totalorder %s222, %s223
      %p232 = scmp.eq.s32.totalorder %s39, 0
      %p233 = por %p231, %p232
      %p234 = scmp.ne.s32.totalorder %s222, %s223
      %p235 = scmp.eq.s32.totalorder %s40, 1
      %p236 = por %p234, %p235
      %p238 = scmp.ne.s32.totalorder %s223, %s237
      %p239 = scmp.eq.s32.totalorder %s40, 0
      %p240 = por %p238, %p239
      %s242 = sadd.s32 %s241, 1
      %p245 = scmp.eq.s32.totalorder %s34, 1
      %p246 = scmp.ne.s32.totalorder %s241, %s243
      %p247 = scmp.eq.s32.totalorder %s34, 0
      %p248 = por %p246, %p247
      %p249 = scmp.ne.s32.totalorder %s241, %s243
      %p250 = scmp.eq.s32.totalorder %s39, 1
      %p251 = por %p249, %p250
      %p252 = scmp.ne.s32.totalorder %s243, %s244
      %p253 = scmp.eq.s32.totalorder %s39, 0
      %p254 = por %p252, %p253
      %p255 = scmp.ne.s32.totalorder %s243, %s244
      %p256 = scmp.eq.s32.totalorder %s40, 1
      %p257 = por %p255, %p256
      %p259 = scmp.ne.s32.totalorder %s244, %s258
      %p260 = scmp.eq.s32.totalorder %s40, 0
      %p261 = por %p259, %p260
      %s263 = sadd.s32 %s262, 1
      %p266 = scmp.eq.s32.totalorder %s34, 1
      %p267 = scmp.ne.s32.totalorder %s262, %s264
      %p268 = scmp.eq.s32.totalorder %s34, 0
      %p269 = por %p267, %p268
      %p270 = scmp.ne.s32.totalorder %s262, %s264
      %p271 = scmp.eq.s32.totalorder %s39, 1
      %p272 = por %p270, %p271
      %p273 = scmp.ne.s32.totalorder %s264, %s265
      %p274 = scmp.eq.s32.totalorder %s39, 0
      %p275 = por %p273, %p274
      %p276 = scmp.ne.s32.totalorder %s264, %s265
      %p277 = scmp.eq.s32.totalorder %s40, 1
      %p278 = por %p276, %p277
      %p280 = scmp.ne.s32.totalorder %s265, %s279
      %p281 = scmp.eq.s32.totalorder %s40, 0
      %p282 = por %p280, %p281
      %s284 = sadd.s32 %s283, 1
      %p287 = scmp.eq.s32.totalorder %s34, 1
      %p288 = scmp.ne.s32.totalorder %s283, %s285
      %p289 = scmp.eq.s32.totalorder %s34, 0
      %p290 = por %p288, %p289
      %p291 = scmp.ne.s32.totalorder %s283, %s285
      %p292 = scmp.eq.s32.totalorder %s39, 1
      %p293 = por %p291, %p292
      %p294 = scmp.ne.s32.totalorder %s285, %s286
      %p295 = scmp.eq.s32.totalorder %s39, 0
      %p296 = por %p294, %p295
      %p297 = scmp.ne.s32.totalorder %s285, %s286
      %p298 = scmp.eq.s32.totalorder %s40, 1
      %p299 = por %p297, %p298
      %p301 = scmp.ne.s32.totalorder %s286, %s300
      %p302 = scmp.eq.s32.totalorder %s40, 0
      %p303 = por %p301, %p302
      %s305 = sadd.s32 %s304, 1
      %p308 = scmp.eq.s32.totalorder %s34, 1
      %p309 = scmp.ne.s32.totalorder %s304, %s306
      %p310 = scmp.eq.s32.totalorder %s34, 0
      %p311 = por %p309, %p310
      %p312 = scmp.ne.s32.totalorder %s304, %s306
      %p313 = scmp.eq.s32.totalorder %s39, 1
      %p314 = por %p312, %p313
      %p315 = scmp.ne.s32.totalorder %s306, %s307
      %p316 = scmp.eq.s32.totalorder %s39, 0
      %p317 = por %p315, %p316
      %p318 = scmp.ne.s32.totalorder %s306, %s307
      %p319 = scmp.eq.s32.totalorder %s40, 1
      %p320 = por %p318, %p319
      %p322 = scmp.ne.s32.totalorder %s307, %s321
      %p323 = scmp.eq.s32.totalorder %s40, 0
      %p324 = por %p322, %p323
      %s326 = sadd.s32 %s325, 1
      %p329 = scmp.eq.s32.totalorder %s34, 1
      %p330 = scmp.ne.s32.totalorder %s325, %s327
      %p331 = scmp.eq.s32.totalorder %s34, 0
      %p332 = por %p330, %p331
      %p333 = scmp.ne.s32.totalorder %s325, %s327
      %p334 = scmp.eq.s32.totalorder %s39, 1
      %p335 = por %p333, %p334
      %p336 = scmp.ne.s32.totalorder %s327, %s328
      %p337 = scmp.eq.s32.totalorder %s39, 0
      %p338 = por %p336, %p337
      %p339 = scmp.ne.s32.totalorder %s327, %s328
      %p340 = scmp.eq.s32.totalorder %s40, 1
      %p341 = por %p339, %p340
      %p343 = scmp.ne.s32.totalorder %s328, %s342
      %p344 = scmp.eq.s32.totalorder %s40, 0
      %p345 = por %p343, %p344
      %s347 = sadd.s32 %s346, 1
      %p350 = scmp.eq.s32.totalorder %s34, 1
      %p351 = scmp.ne.s32.totalorder %s346, %s348
      %p352 = scmp.eq.s32.totalorder %s34, 0
      %p353 = por %p351, %p352
      %p354 = scmp.ne.s32.totalorder %s346, %s348
      %p355 = scmp.eq.s32.totalorder %s39, 1
      %p356 = por %p354, %p355
      %p357 = scmp.ne.s32.totalorder %s348, %s349
      %p358 = scmp.eq.s32.totalorder %s39, 0
      %p359 = por %p357, %p358
      %p360 = scmp.ne.s32.totalorder %s348, %s349
      %p361 = scmp.eq.s32.totalorder %s40, 1
      %p362 = por %p360, %p361
      %p364 = scmp.ne.s32.totalorder %s349, %s363
      %p365 = scmp.eq.s32.totalorder %s40, 0
      %p366 = por %p364, %p365
      %s368 = sadd.s32 %s367, 1
      %p371 = scmp.eq.s32.totalorder %s34, 1
      %p372 = scmp.ne.s32.totalorder %s367, %s369
      %p373 = scmp.eq.s32.totalorder %s34, 0
      %p374 = por %p372, %p373
      %p375 = scmp.ne.s32.totalorder %s367, %s369
      %p376 = scmp.eq.s32.totalorder %s39, 1
      %p377 = por %p375, %p376
      %p378 = scmp.ne.s32.totalorder %s369, %s370
      %p379 = scmp.eq.s32.totalorder %s39, 0
      %p380 = por %p378, %p379
      %p381 = scmp.ne.s32.totalorder %s369, %s370
      %p382 = scmp.eq.s32.totalorder %s40, 1
      %p383 = por %p381, %p382
      %p385 = scmp.ne.s32.totalorder %s370, %s384
      %p386 = scmp.eq.s32.totalorder %s40, 0
      %p387 = por %p385, %p386
      %s389 = sadd.s32 %s388, 1
      %p392 = scmp.eq.s32.totalorder %s34, 1
      %p393 = scmp.ne.s32.totalorder %s388, %s390
      %p394 = scmp.eq.s32.totalorder %s34, 0
      %p395 = por %p393, %p394
      %p396 = scmp.ne.s32.totalorder %s388, %s390
      %p397 = scmp.eq.s32.totalorder %s39, 1
      %p398 = por %p396, %p397
      %p399 = scmp.ne.s32.totalorder %s390, %s391
      %p400 = scmp.eq.s32.totalorder %s39, 0
      %p401 = por %p399, %p400
      %p402 = scmp.ne.s32.totalorder %s390, %s391
      %p403 = scmp.eq.s32.totalorder %s40, 1
      %p404 = por %p402, %p403
      %p406 = scmp.ne.s32.totalorder %s391, %s405
      %p407 = scmp.eq.s32.totalorder %s40, 0
      %p408 = por %p406, %p407
      %s410 = sadd.s32 %s409, 1
      %p413 = scmp.eq.s32.totalorder %s34, 1
      %p414 = scmp.ne.s32.totalorder %s409, %s411
      %p415 = scmp.eq.s32.totalorder %s34, 0
      %p416 = por %p414, %p415
      %p417 = scmp.ne.s32.totalorder %s409, %s411
      %p418 = scmp.eq.s32.totalorder %s39, 1
      %p419 = por %p417, %p418
      %p420 = scmp.ne.s32.totalorder %s411, %s412
      %p421 = scmp.eq.s32.totalorder %s39, 0
      %p422 = por %p420, %p421
      %p423 = scmp.ne.s32.totalorder %s411, %s412
      %p424 = scmp.eq.s32.totalorder %s40, 1
      %p425 = por %p423, %p424
      %p427 = scmp.ne.s32.totalorder %s412, %s426
      %p428 = scmp.eq.s32.totalorder %s40, 0
      %p429 = por %p427, %p428
      %s431 = sadd.s32 %s430, 1
      %p434 = scmp.eq.s32.totalorder %s34, 1
      %p435 = scmp.ne.s32.totalorder %s430, %s432
      %p436 = scmp.eq.s32.totalorder %s34, 0
      %p437 = por %p435, %p436
      %p438 = scmp.ne.s32.totalorder %s430, %s432
      %p439 = scmp.eq.s32.totalorder %s39, 1
      %p440 = por %p438, %p439
      %p441 = scmp.ne.s32.totalorder %s432, %s433
      %p442 = scmp.eq.s32.totalorder %s39, 0
      %p443 = por %p441, %p442
      %p444 = scmp.ne.s32.totalorder %s432, %s433
      %p445 = scmp.eq.s32.totalorder %s40, 1
      %p446 = por %p444, %p445
      %p448 = scmp.ne.s32.totalorder %s433, %s447
      %p449 = scmp.eq.s32.totalorder %s40, 0
      %p450 = por %p448, %p449
      %s452 = sadd.s32 %s451, 1
      %p455 = scmp.eq.s32.totalorder %s34, 1
      %p456 = scmp.ne.s32.totalorder %s451, %s453
      %p457 = scmp.eq.s32.totalorder %s34, 0
      %p458 = por %p456, %p457
      %p459 = scmp.ne.s32.totalorder %s451, %s453
      %p460 = scmp.eq.s32.totalorder %s39, 1
      %p461 = por %p459, %p460
      %p462 = scmp.ne.s32.totalorder %s453, %s454
      %p463 = scmp.eq.s32.totalorder %s39, 0
      %p464 = por %p462, %p463
      %p465 = scmp.ne.s32.totalorder %s453, %s454
      %p466 = scmp.eq.s32.totalorder %s40, 1
      %p467 = por %p465, %p466
      %p469 = scmp.ne.s32.totalorder %s454, %s468
      %p470 = scmp.eq.s32.totalorder %s40, 0
      %p471 = por %p469, %p470
      %s473 = sadd.s32 %s472, 1
      %p476 = scmp.eq.s32.totalorder %s34, 1
      %p477 = scmp.ne.s32.totalorder %s472, %s474
      %p478 = scmp.eq.s32.totalorder %s34, 0
      %p479 = por %p477, %p478
      %p480 = scmp.ne.s32.totalorder %s472, %s474
      %p481 = scmp.eq.s32.totalorder %s39, 1
      %p482 = por %p480, %p481
      %p483 = scmp.ne.s32.totalorder %s474, %s475
      %p484 = scmp.eq.s32.totalorder %s39, 0
      %p485 = por %p483, %p484
      %p486 = scmp.ne.s32.totalorder %s474, %s475
      %p487 = scmp.eq.s32.totalorder %s40, 1
      %p488 = por %p486, %p487
      %p490 = scmp.ne.s32.totalorder %s475, %s489
      %p491 = scmp.eq.s32.totalorder %s40, 0
      %p492 = por %p490, %p491
      %s494 = sadd.s32 %s493, 1
      %p497 = scmp.eq.s32.totalorder %s34, 1
      %p498 = scmp.ne.s32.totalorder %s493, %s495
      %p499 = scmp.eq.s32.totalorder %s34, 0
      %p500 = por %p498, %p499
      %p501 = scmp.ne.s32.totalorder %s493, %s495
      %p502 = scmp.eq.s32.totalorder %s39, 1
      %p503 = por %p501, %p502
      %p504 = scmp.ne.s32.totalorder %s495, %s496
      %p505 = scmp.eq.s32.totalorder %s39, 0
      %p506 = por %p504, %p505
      %p507 = scmp.ne.s32.totalorder %s495, %s496
      %p508 = scmp.eq.s32.totalorder %s40, 1
      %p509 = por %p507, %p508
      %p511 = scmp.ne.s32.totalorder %s496, %s510
      %p512 = scmp.eq.s32.totalorder %s40, 0
      %p513 = por %p511, %p512
      %s515 = sadd.s32 %s514, 1
      %p518 = scmp.eq.s32.totalorder %s34, 1
      %p519 = scmp.ne.s32.totalorder %s514, %s516
      %p520 = scmp.eq.s32.totalorder %s34, 0
      %p521 = por %p519, %p520
      %p522 = scmp.ne.s32.totalorder %s514, %s516
      %p523 = scmp.eq.s32.totalorder %s39, 1
      %p524 = por %p522, %p523
      %p525 = scmp.ne.s32.totalorder %s516, %s517
      %p526 = scmp.eq.s32.totalorder %s39, 0
      %p527 = por %p525, %p526
      %p528 = scmp.ne.s32.totalorder %s516, %s517
      %p529 = scmp.eq.s32.totalorder %s40, 1
      %p530 = por %p528, %p529
      %p532 = scmp.ne.s32.totalorder %s517, %s531
      %p533 = scmp.eq.s32.totalorder %s40, 0
      %p534 = por %p532, %p533
      %s535 = ssub.s32 %s34, %s41
      %p536 = scmp.eq.s32.totalorder %s535, 0
      %s538 = sadd.s32 %s537, 1
      %s539 = scalar_select %p536, %s537, %s538
      %p542 = pneg %p536
      %p543 = scmp.eq.s32.totalorder %s34, 1
      %p544 = por %p542, %p543
      %p545 = scmp.ne.s32.totalorder %s537, %s540
      %p546 = scmp.eq.s32.totalorder %s34, 0
      %p547 = por %p545, %p546
      %p548 = scmp.ne.s32.totalorder %s537, %s540
      %p549 = scmp.eq.s32.totalorder %s39, 1
      %p550 = por %p548, %p549
      %p551 = scmp.ne.s32.totalorder %s540, %s541
      %p552 = scmp.eq.s32.totalorder %s39, 0
      %p553 = por %p551, %p552
      %p554 = scmp.ne.s32.totalorder %s540, %s541
      %p555 = scmp.eq.s32.totalorder %s40, 1
      %p556 = por %p554, %p555
      %p558 = scmp.ne.s32.totalorder %s541, %s557
      %p559 = scmp.eq.s32.totalorder %s40, 0
      %p560 = por %p558, %p559
      %p561 = scmp.le.s32.totalorder 1, %s34
      %p562 = scmp.lt.s32.totalorder %s34, 3
      %p563 = pnand %p561, %p562
      %p564 = pneg %p563
      // Predicated region
      $region9: #{model_forward.1} parent=5 // pred_check
        _
      $region10: #{model_forward.1} parent=5 // pred_check_branch
        %566 = sbr.rel (%p563) target = $region12
      $region11: #{model_forward.1} parent=5 // pred_region
        %s567 = ssub.s32 %s34, 1
        // Predicated region
        $region13: #{model_forward.1} parent=11 // pred_check
          %p568 = pneg %p107
        $region14: #{model_forward.1} parent=11 // pred_check_branch
          %570 = sbr.rel (%p568) target = $region16
        $region15: #{model_forward.1} parent=11 // pred_region
          _
        $region16: #{model_forward.1} parent=11 // pred_fallthru
          _
        // Predicated region
        $region17: #{model_forward.1} parent=11 // pred_check
          %p571 = pneg %p128
        $region18: #{model_forward.1} parent=11 // pred_check_branch
          %573 = sbr.rel (%p571) target = $region20
        $region19: #{model_forward.1} parent=11 // pred_region
          _
        $region20: #{model_forward.1} parent=11 // pred_fallthru
          _
        // Predicated region
        $region21: #{model_forward.1} parent=11 // pred_check
          %p574 = pneg %p149
        $region22: #{model_forward.1} parent=11 // pred_check_branch
          %576 = sbr.rel (%p574) target = $region24
        $region23: #{model_forward.1} parent=11 // pred_region
          _
        $region24: #{model_forward.1} parent=11 // pred_fallthru
          _
        // Predicated region
        $region25: #{model_forward.1} parent=11 // pred_check
          %p577 = pneg %p170
        $region26: #{model_forward.1} parent=11 // pred_check_branch
          %579 = sbr.rel (%p577) target = $region28
        $region27: #{model_forward.1} parent=11 // pred_region
          _
        $region28: #{model_forward.1} parent=11 // pred_fallthru
          _
        // Predicated region
        $region29: #{model_forward.1} parent=11 // pred_check
          %p580 = pneg %p191
        $region30: #{model_forward.1} parent=11 // pred_check_branch
          %582 = sbr.rel (%p580) target = $region32
        $region31: #{model_forward.1} parent=11 // pred_region
          _
        $region32: #{model_forward.1} parent=11 // pred_fallthru
          _
        // Predicated region
        $region33: #{model_forward.1} parent=11 // pred_check
          %p583 = pneg %p212
        $region34: #{model_forward.1} parent=11 // pred_check_branch
          %585 = sbr.rel (%p583) target = $region36
        $region35: #{model_forward.1} parent=11 // pred_region
          _
        $region36: #{model_forward.1} parent=11 // pred_fallthru
          _
        // Predicated region
        $region37: #{model_forward.1} parent=11 // pred_check
          %p586 = pneg %p233
        $region38: #{model_forward.1} parent=11 // pred_check_branch
          %588 = sbr.rel (%p586) target = $region40
        $region39: #{model_forward.1} parent=11 // pred_region
          _
        $region40: #{model_forward.1} parent=11 // pred_fallthru
          _
        // Predicated region
        $region41: #{model_forward.1} parent=11 // pred_check
          %p589 = pneg %p254
        $region42: #{model_forward.1} parent=11 // pred_check_branch
          %591 = sbr.rel (%p589) target = $region44
        $region43: #{model_forward.1} parent=11 // pred_region
          _
        $region44: #{model_forward.1} parent=11 // pred_fallthru
          _
        // Predicated region
        $region45: #{model_forward.1} parent=11 // pred_check
          %p592 = pneg %p275
        $region46: #{model_forward.1} parent=11 // pred_check_branch
          %594 = sbr.rel (%p592) target = $region48
        $region47: #{model_forward.1} parent=11 // pred_region
          _
        $region48: #{model_forward.1} parent=11 // pred_fallthru
          _
        // Predicated region
        $region49: #{model_forward.1} parent=11 // pred_check
          %p595 = pneg %p296
        $region50: #{model_forward.1} parent=11 // pred_check_branch
          %597 = sbr.rel (%p595) target = $region52
        $region51: #{model_forward.1} parent=11 // pred_region
          %s599 = ssub.s32 1024, 1024
          %600 = vsyncadd [#allocation3], %s599
          %s601 = sshll.u32 [#allocation2], 4
          %s602 = int_to_ptr.vmem [resolvable:$true] %s601
          %607 = dma.hbm_to_vmem [thread:$0]  %s11, 1024, %s602, [#allocation3], 64, 64, 4
        $region52: #{model_forward.1} parent=11 // pred_fallthru
          _
        // Predicated region
        $region53: #{model_forward.1} parent=11 // pred_check
          %p608 = pneg %p317
        $region54: #{model_forward.1} parent=11 // pred_check_branch
          %610 = sbr.rel (%p608) target = $region56
        $region55: #{model_forward.1} parent=11 // pred_region
          _
        $region56: #{model_forward.1} parent=11 // pred_fallthru
          _
        // Predicated region
        $region57: #{model_forward.1} parent=11 // pred_check
          %p611 = pneg %p338
        $region58: #{model_forward.1} parent=11 // pred_check_branch
          %613 = sbr.rel (%p611) target = $region60
        $region59: #{model_forward.1} parent=11 // pred_region
          _
        $region60: #{model_forward.1} parent=11 // pred_fallthru
          _
        // Predicated region
        $region61: #{model_forward.1} parent=11 // pred_check
          %p614 = pneg %p359
        $region62: #{model_forward.1} parent=11 // pred_check_branch
          %616 = sbr.rel (%p614) target = $region64
        $region63: #{model_forward.1} parent=11 // pred_region
          _
        $region64: #{model_forward.1} parent=11 // pred_fallthru
          _
        // Predicated region
        $region65: #{model_forward.1} parent=11 // pred_check
          %p617 = pneg %p380
        $region66: #{model_forward.1} parent=11 // pred_check_branch
          %619 = sbr.rel (%p617) target = $region68
        $region67: #{model_forward.1} parent=11 // pred_region
          _
        $region68: #{model_forward.1} parent=11 // pred_fallthru
          _
        // Predicated region
        $region69: #{model_forward.1} parent=11 // pred_check
          %p620 = pneg %p401
        $region70: #{model_forward.1} parent=11 // pred_check_branch
          %622 = sbr.rel (%p620) target = $region72
        $region71: #{model_forward.1} parent=11 // pred_region
          _
        $region72: #{model_forward.1} parent=11 // pred_fallthru
          _
        // Predicated region
        $region73: #{model_forward.1} parent=11 // pred_check
          %p623 = pneg %p422
        $region74: #{model_forward.1} parent=11 // pred_check_branch
          %625 = sbr.rel (%p623) target = $region76
        $region75: #{model_forward.1} parent=11 // pred_region
          %s627 = ssub.s32 4096, 4096
          %628 = vsyncadd [#allocation6], %s627
          %s629 = sshll.u32 [#allocation5], 4
          %s630 = int_to_ptr.vmem [resolvable:$true] %s629
          %635 = dma.hbm_to_vmem [thread:$0]  %s17, 4096, %s630, [#allocation6], 64, 64, 4
        $region76: #{model_forward.1} parent=11 // pred_fallthru
          _
        // Predicated region
        $region77: #{model_forward.1} parent=11 // pred_check
          %p636 = pneg %p443
        $region78: #{model_forward.1} parent=11 // pred_check_branch
          %638 = sbr.rel (%p636) target = $region80
        $region79: #{model_forward.1} parent=11 // pred_region
          _
        $region80: #{model_forward.1} parent=11 // pred_fallthru
          _
        // Predicated region
        $region81: #{model_forward.1} parent=11 // pred_check
          %p639 = pneg %p464
        $region82: #{model_forward.1} parent=11 // pred_check_branch
          %641 = sbr.rel (%p639) target = $region84
        $region83: #{model_forward.1} parent=11 // pred_region
          _
        $region84: #{model_forward.1} parent=11 // pred_fallthru
          _
        // Predicated region
        $region85: #{model_forward.1} parent=11 // pred_check
          %p642 = pneg %p485
        $region86: #{model_forward.1} parent=11 // pred_check_branch
          %644 = sbr.rel (%p642) target = $region88
        $region87: #{model_forward.1} parent=11 // pred_region
          _
        $region88: #{model_forward.1} parent=11 // pred_fallthru
          _
        // Predicated region
        $region89: #{model_forward.1} parent=11 // pred_check
          %p645 = pneg %p506
        $region90: #{model_forward.1} parent=11 // pred_check_branch
          %647 = sbr.rel (%p645) target = $region92
        $region91: #{model_forward.1} parent=11 // pred_region
          _
        $region92: #{model_forward.1} parent=11 // pred_fallthru
          _
        // Predicated region
        $region93: #{model_forward.1} parent=11 // pred_check
          %p648 = pneg %p527
        $region94: #{model_forward.1} parent=11 // pred_check_branch
          %650 = sbr.rel (%p648) target = $region96
        $region95: #{model_forward.1} parent=11 // pred_region
          _
        $region96: #{model_forward.1} parent=11 // pred_fallthru
          _
      $region12: #{model_forward.1} parent=5 // pred_fallthru
        _
      %p651 = scmp.lt.s32.totalorder %s34, 2
      // Predicated region
      $region97: #{model_forward.1} parent=5 // pred_check
        %p652 = pneg %p651
      $region98: #{model_forward.1} parent=5 // pred_check_branch
        %654 = sbr.rel (%p652) target = $region100
      $region99: #{model_forward.1} parent=5 // pred_region
        // Predicated region
        $region101: #{model_forward.1} parent=99 // pred_check
          %p655 = pneg %p54
        $region102: #{model_forward.1} parent=99 // pred_check_branch
          %657 = sbr.rel (%p655) target = $region104
        $region103: #{model_forward.1} parent=99 // pred_region
          %p658 = scmp.lt.s32.totalorder %s34, 1
          %s659 = scalar_select %p658, %s34, 1
          %s660 = scalar_lea.vmem %s0, %s659
        $region104: #{model_forward.1} parent=99 // pred_fallthru
          _
        // Predicated region
        $region105: #{model_forward.1} parent=99 // pred_check
          %p661 = pneg %p80
        $region106: #{model_forward.1} parent=99 // pred_check_branch
          %663 = sbr.rel (%p661) target = $region108
        $region107: #{model_forward.1} parent=99 // pred_region
          %p664 = scmp.lt.s32.totalorder %s34, 1
          %s665 = scalar_select %p664, %s34, 1
          %s666 = smul.addr %s665, 2
          %s667 = smul.addr %s666, 8
          %s668 = scalar_lea.vmem %s1, %s667
        $region108: #{model_forward.1} parent=99 // pred_fallthru
          _
      $region100: #{model_forward.1} parent=5 // pred_fallthru
        _
      %p669 = scmp.le.s32.totalorder 1, %s34
      %p670 = scmp.lt.s32.totalorder %s34, 3
      %p671 = pnand %p669, %p670
      %p672 = pneg %p671
      // Predicated region
      $region109: #{model_forward.1} parent=5 // pred_check
        _
      $region110: #{model_forward.1} parent=5 // pred_check_branch
        %674 = sbr.rel (%p671) target = $region112
      $region111: #{model_forward.1} parent=5 // pred_region
        %s675 = ssub.s32 %s34, 1
        // Predicated region
        $region113: #{model_forward.1} parent=111 // pred_check
          %p676 = pneg %p296
        $region114: #{model_forward.1} parent=111 // pred_check_branch
          %678 = sbr.rel (%p676) target = $region116
        $region115: #{model_forward.1} parent=111 // pred_region
          %679 = dma.done [#allocation3], 1024
        $region116: #{model_forward.1} parent=111 // pred_fallthru
          _
        // Predicated region
        $region117: #{model_forward.1} parent=111 // pred_check
          %p680 = pneg %p422
        $region118: #{model_forward.1} parent=111 // pred_check_branch
          %682 = sbr.rel (%p680) target = $region120
        $region119: #{model_forward.1} parent=111 // pred_region
          %683 = dma.done [#allocation6], 4096
        $region120: #{model_forward.1} parent=111 // pred_fallthru
          _
        %p684 = scmp.lt.s32.totalorder %s39, 1
        %s685 = scalar_select %p684, %s39, 1
        %s686 = scalar_lea.vmem %s0, %s685
        %p687 = pneg %p60
        %p688 = pneg %p57
        %p689 = scmp.lt.s32.totalorder %s39, 1
        %s690 = scalar_select %p689, %s39, 1
        %s691 = smul.addr %s690, 2
        %s692 = smul.addr %s691, 8
        %s693 = scalar_lea.vmem %s1, %s692
        %p694 = pneg %p86
        %p695 = pneg %p83
        %p696 = pneg %p107
        %p697 = pneg %p104
        %p698 = pneg %p128
        %p699 = pneg %p125
        %p700 = pneg %p149
        %p701 = pneg %p146
        %p702 = pneg %p170
        %p703 = pneg %p167
        %p704 = pneg %p191
        %p705 = pneg %p188
        %p706 = pneg %p212
        %p707 = pneg %p209
        %p708 = pneg %p233
        %p709 = pneg %p230
        %p710 = pneg %p254
        %p711 = pneg %p251
        %p712 = pneg %p275
        %p713 = pneg %p272
        %p714 = pneg %p296
        %p715 = pneg %p293
        %p716 = pneg %p317
        %p717 = pneg %p314
        %p718 = pneg %p338
        %p719 = pneg %p335
        %p720 = pneg %p359
        %p721 = pneg %p356
        %p722 = pneg %p380
        %p723 = pneg %p377
        %p724 = pneg %p401
        %p725 = pneg %p398
        %p726 = pneg %p422
        %p727 = pneg %p419
        %p728 = pneg %p443
        %p729 = pneg %p440
        %p730 = pneg %p464
        %p731 = pneg %p461
        %p732 = pneg %p485
        %p733 = pneg %p482
        %p734 = pneg %p506
        %p735 = pneg %p503
        %p736 = pneg %p527
        %p737 = pneg %p524
        %p738 = pneg %p553
        %p739 = pneg %p550
        %s740 = sand.u32 %s540, 1
        %s741 = scalar_lea.sflag [#allocation4], %s740
        %s742 = sand.u32 %s540, 1
        %s743 = scalar_lea.vmem [#allocation7], %s742
        %p744 = scmp.lt.s32.totalorder %s39, 1
        %s745 = scalar_select %p744, %s39, 1
        %s746 = scalar_lea.vmem %s0, %s745
        %p747 = scmp.lt.s32.totalorder %s39, 1
        %s748 = scalar_select %p747, %s39, 1
        %s749 = smul.addr %s748, 2
        %s750 = smul.addr %s749, 8
        %s751 = scalar_lea.vmem %s1, %s750
        %v753 = vld [vmem:[%s751] sm:$0xff]
        %v754 = vld [vmem:[%s751 + $0x8] sm:$0xff]
        %v755 = vld [vmem:[%s3] sm:$0x1]
        %v756 = vld [vmem:[%s4] sm:$0x1]
        %757 = vadd.xlane.f32.xlu0 %v753
        %v758 = vpop.xlane.xlu0 %757
        %759 = vadd.xlane.f32.xlu0 %v754
        %v760 = vpop.xlane.xlu0 %759
        %v761 = vrcp.pop 128.0
        %v762 = vmul.f32 %v758, %v761
        %v763 = vmul.f32 %v760, %v761
        %v764 = vsub.f32 %v753, %v762
        %v765 = vsub.f32 %v754, %v763
        %v766 = vmul.f32 %v764, %v764
        %v767 = vmul.f32 %v765, %v765
        %768 = vadd.xlane.f32.xlu0 %v766
        %v769 = vpop.xlane.xlu0 %768
        %770 = vadd.xlane.f32.xlu0 %v767
        %v771 = vpop.xlane.xlu0 %770
        %v772 = vmul.f32 %v769, %v761
        %v773 = vmul.f32 %v771, %v761
        %v774 = vadd.f32 %v772, 1e-05
        %v775 = vadd.f32 %v773, 1e-05
        %v776 = vrsqrt.pop %v774
        %v777 = vrsqrt.pop %v775
        %v778 = vmul.f32 %v764, %v776
        %v779 = vmul.f32 %v765, %v777
        %v781 = vlaneseq
        %v782 = vshrl.u32 %v781, 7
        %v783 = vsub.s32 0, %v782
        %v784 = vrot.slane %v755, %v783
        %v786 = vmul.f32 %v778, %v784
        %v787 = vmul.f32 %v779, %v784
        %v789 = vlaneseq
        %v790 = vshrl.u32 %v789, 7
        %v791 = vsub.s32 0, %v790
        %v792 = vrot.slane %v756, %v791
        %v794 = vadd.f32 %v786, %v792
        %v795 = vadd.f32 %v787, %v792
        %v796 = vpack.c.bf16 %v795, %v794
        %v797 = vld [vmem:[%s5] sm:$0xf]
        %v798 = vld [vmem:[%s5 + $0x4] sm:$0xf]
        %v799 = vld [vmem:[%s5 + $0x8] sm:$0xf]
        %v800 = vld [vmem:[%s5 + $0xc] sm:$0xf]
        %v801 = vld [vmem:[%s5 + $0x10] sm:$0xf]
        %v802 = vld [vmem:[%s5 + $0x14] sm:$0xf]
        %v803 = vld [vmem:[%s5 + $0x18] sm:$0xf]
        %v804 = vld [vmem:[%s5 + $0x1c] sm:$0xf]
        %v805 = vld [vmem:[%s5 + $0x20] sm:$0xf]
        %v806 = vld [vmem:[%s5 + $0x24] sm:$0xf]
        %v807 = vld [vmem:[%s5 + $0x28] sm:$0xf]
        %v808 = vld [vmem:[%s5 + $0x2c] sm:$0xf]
        %v809 = vld [vmem:[%s5 + $0x30] sm:$0xf]
        %v810 = vld [vmem:[%s5 + $0x34] sm:$0xf]
        %v811 = vld [vmem:[%s5 + $0x38] sm:$0xf]
        %v812 = vld [vmem:[%s5 + $0x3c] sm:$0xf]
        %v813 = vld [vmem:[%s6] sm:$0x1]
        %v815 = vlaneseq
        %v816 = vshrl.u32 %v815, 7
        %v817 = vsub.s32 0, %v816
        %v818 = vrot.slane %v813, %v817
        %v836 = vunpack.c.l.b16 %v797
        %v837 = vunpack.c.l.b16 %v798
        %v838 = vunpack.c.l.b16 %v799
        %v839 = vunpack.c.l.b16 %v800
        %v840 = vunpack.c.l.b16 %v801
        %v841 = vunpack.c.l.b16 %v802
        %v842 = vunpack.c.l.b16 %v803
        %v843 = vunpack.c.l.b16 %v804
        %v844 = vunpack.c.l.b16 %v805
        %v845 = vunpack.c.l.b16 %v806
        %v846 = vunpack.c.l.b16 %v807
        %v847 = vunpack.c.l.b16 %v808
        %v848 = vunpack.c.l.b16 %v809
        %v849 = vunpack.c.l.b16 %v810
        %v850 = vunpack.c.l.b16 %v811
        %v851 = vunpack.c.l.b16 %v812
        %v852 = vpack.c.b16 %v837, %v836
        %v853 = vpack.c.b16 %v839, %v838
        %v854 = vpack.c.b16 %v841, %v840
        %v855 = vpack.c.b16 %v843, %v842
        %v856 = vpack.c.b16 %v845, %v844
        %v857 = vpack.c.b16 %v847, %v846
        %v858 = vpack.c.b16 %v849, %v848
        %v859 = vpack.c.b16 %v851, %v850
        %868 = vmatprep.subr.bf16.mxu0 0
        %869 = vmatpush1.bf16.msra.mxu0 %v852
        %870 = vmatprep.subr.bf16.mxu0 0
        %871 = vmatpush1.bf16.msra.mxu0 %v853
        %872 = vmatprep.subr.bf16.mxu0 0
        %873 = vmatpush1.bf16.msra.mxu0 %v854
        %874 = vmatprep.subr.bf16.mxu0 0
        %875 = vmatpush1.bf16.msra.mxu0 %v855
        %876 = vmatprep.subr.bf16.mxu0 0
        %877 = vmatpush1.bf16.msra.mxu0 %v856
        %878 = vmatprep.subr.bf16.mxu0 0
        %879 = vmatpush1.bf16.msra.mxu0 %v857
        %880 = vmatprep.subr.bf16.mxu0 0
        %881 = vmatpush1.bf16.msra.mxu0 %v858
        %882 = vmatprep.subr.bf16.mxu0 0
        %883 = vmatpush1.bf16.msra.mxu0 %v859
        %884 = vmatprep.subr.bf16.mxu0 0
        %885 = vmatpush1.bf16.msra.mxu0 0
        %886 = vmatprep.subr.bf16.mxu0 0
        %887 = vmatpush1.bf16.msra.mxu0 0
        %888 = vmatprep.subr.bf16.mxu0 0
        %889 = vmatpush1.bf16.msra.mxu0 0
        %890 = vmatprep.subr.bf16.mxu0 0
        %891 = vmatpush1.bf16.msra.mxu0 0
        %892 = vmatprep.subr.bf16.mxu0 0
        %893 = vmatpush1.bf16.msra.mxu0 0
        %894 = vmatprep.subr.bf16.mxu0 0
        %895 = vmatpush1.bf16.msra.mxu0 0
        %896 = vmatprep.subr.bf16.mxu0 0
        %897 = vmatpush1.bf16.msra.mxu0 0
        %898 = vmatprep.subr.bf16.mxu0 0
        %899 = vmatpush1.bf16.msra.mxu0 0
        %900 = vmatprep.mubr.bf16.mxu0 0
        %901 = vmatmul.mubr.bf16.gmra.mrb[0].mxu0 %v796
        %v902 = vpop.f32.mrb[0].mxu0
        %v903 = vadd.f32 %v818, %v902
        %v904 = vpop.f32.mrb[0].mxu0
        %v905 = vpop.f32.mrb[0].mxu0
        %v906 = vadd.f32 %v818, %v905
        %v907 = vpop.f32.mrb[0].mxu0
        %908 = vdwg.mxu0
        %v909 = vld [vmem:[%s7] sm:$0xf]
        %v910 = vld [vmem:[%s7 + $0x4] sm:$0xf]
        %v911 = vld [vmem:[%s7 + $0x8] sm:$0xf]
        %v912 = vld [vmem:[%s7 + $0xc] sm:$0xf]
        %v913 = vld [vmem:[%s7 + $0x10] sm:$0xf]
        %v914 = vld [vmem:[%s7 + $0x14] sm:$0xf]
        %v915 = vld [vmem:[%s7 + $0x18] sm:$0xf]
        %v916 = vld [vmem:[%s7 + $0x1c] sm:$0xf]
        %v917 = vld [vmem:[%s7 + $0x20] sm:$0xf]
        %v918 = vld [vmem:[%s7 + $0x24] sm:$0xf]
        %v919 = vld [vmem:[%s7 + $0x28] sm:$0xf]
        %v920 = vld [vmem:[%s7 + $0x2c] sm:$0xf]
        %v921 = vld [vmem:[%s7 + $0x30] sm:$0xf]
        %v922 = vld [vmem:[%s7 + $0x34] sm:$0xf]
        %v923 = vld [vmem:[%s7 + $0x38] sm:$0xf]
        %v924 = vld [vmem:[%s7 + $0x3c] sm:$0xf]
        %v925 = vld [vmem:[%s8] sm:$0x1]
        %v927 = vlaneseq
        %v928 = vshrl.u32 %v927, 7
        %v929 = vsub.s32 0, %v928
        %v930 = vrot.slane %v925, %v929
        %v948 = vunpack.c.l.b16 %v909
        %v949 = vunpack.c.l.b16 %v910
        %v950 = vunpack.c.l.b16 %v911
        %v951 = vunpack.c.l.b16 %v912
        %v952 = vunpack.c.l.b16 %v913
        %v953 = vunpack.c.l.b16 %v914
        %v954 = vunpack.c.l.b16 %v915
        %v955 = vunpack.c.l.b16 %v916
        %v956 = vunpack.c.l.b16 %v917
        %v957 = vunpack.c.l.b16 %v918
        %v958 = vunpack.c.l.b16 %v919
        %v959 = vunpack.c.l.b16 %v920
        %v960 = vunpack.c.l.b16 %v921
        %v961 = vunpack.c.l.b16 %v922
        %v962 = vunpack.c.l.b16 %v923
        %v963 = vunpack.c.l.b16 %v924
        %v964 = vpack.c.b16 %v949, %v948
        %v965 = vpack.c.b16 %v951, %v950
        %v966 = vpack.c.b16 %v953, %v952
        %v967 = vpack.c.b16 %v955, %v954
        %v968 = vpack.c.b16 %v957, %v956
        %v969 = vpack.c.b16 %v959, %v958
        %v970 = vpack.c.b16 %v961, %v960
        %v971 = vpack.c.b16 %v963, %v962
        %980 = vmatprep.subr.bf16.mxu0 0
        %981 = vmatpush1.bf16.msra.mxu0 %v964
        %982 = vmatprep.subr.bf16.mxu0 0
        %983 = vmatpush1.bf16.msra.mxu0 %v965
        %984 = vmatprep.subr.bf16.mxu0 0
        %985 = vmatpush1.bf16.msra.mxu0 %v966
        %986 = vmatprep.subr.bf16.mxu0 0
        %987 = vmatpush1.bf16.msra.mxu0 %v967
        %988 = vmatprep.subr.bf16.mxu0 0
        %989 = vmatpush1.bf16.msra.mxu0 %v968
        %990 = vmatprep.subr.bf16.mxu0 0
        %991 = vmatpush1.bf16.msra.mxu0 %v969
        %992 = vmatprep.subr.bf16.mxu0 0
        %993 = vmatpush1.bf16.msra.mxu0 %v970
        %994 = vmatprep.subr.bf16.mxu0 0
        %995 = vmatpush1.bf16.msra.mxu0 %v971
        %996 = vmatprep.subr.bf16.mxu0 0
        %997 = vmatpush1.bf16.msra.mxu0 0
        %998 = vmatprep.subr.bf16.mxu0 0
        %999 = vmatpush1.bf16.msra.mxu0 0
        %1000 = vmatprep.subr.bf16.mxu0 0
        %1001 = vmatpush1.bf16.msra.mxu0 0
        %1002 = vmatprep.subr.bf16.mxu0 0
        %1003 = vmatpush1.bf16.msra.mxu0 0
        %1004 = vmatprep.subr.bf16.mxu0 0
        %1005 = vmatpush1.bf16.msra.mxu0 0
        %1006 = vmatprep.subr.bf16.mxu0 0
        %1007 = vmatpush1.bf16.msra.mxu0 0
        %1008 = vmatprep.subr.bf16.mxu0 0
        %1009 = vmatpush1.bf16.msra.mxu0 0
        %1010 = vmatprep.subr.bf16.mxu0 0
        %1011 = vmatpush1.bf16.msra.mxu0 0
        %1012 = vmatprep.mubr.bf16.mxu0 0
        %1013 = vmatmul.mubr.bf16.gmra.mrb[0].mxu0 %v796
        %v1014 = vpop.f32.mrb[0].mxu0
        %v1015 = vadd.f32 %v930, %v1014
        %v1016 = vpop.f32.mrb[0].mxu0
        %v1017 = vpop.f32.mrb[0].mxu0
        %v1018 = vadd.f32 %v930, %v1017
        %v1019 = vpop.f32.mrb[0].mxu0
        %1020 = vdwg.mxu0
        %v1021 = vld [vmem:[%s9] sm:$0xf]
        %v1022 = vld [vmem:[%s9 + $0x4] sm:$0xf]
        %v1023 = vld [vmem:[%s9 + $0x8] sm:$0xf]
        %v1024 = vld [vmem:[%s9 + $0xc] sm:$0xf]
        %v1025 = vld [vmem:[%s9 + $0x10] sm:$0xf]
        %v1026 = vld [vmem:[%s9 + $0x14] sm:$0xf]
        %v1027 = vld [vmem:[%s9 + $0x18] sm:$0xf]
        %v1028 = vld [vmem:[%s9 + $0x1c] sm:$0xf]
        %v1029 = vld [vmem:[%s9 + $0x20] sm:$0xf]
        %v1030 = vld [vmem:[%s9 + $0x24] sm:$0xf]
        %v1031 = vld [vmem:[%s9 + $0x28] sm:$0xf]
        %v1032 = vld [vmem:[%s9 + $0x2c] sm:$0xf]
        %v1033 = vld [vmem:[%s9 + $0x30] sm:$0xf]
        %v1034 = vld [vmem:[%s9 + $0x34] sm:$0xf]
        %v1035 = vld [vmem:[%s9 + $0x38] sm:$0xf]
        %v1036 = vld [vmem:[%s9 + $0x3c] sm:$0xf]
        %v1037 = vld [vmem:[%s10] sm:$0x1]
        %v1039 = vlaneseq
        %v1040 = vshrl.u32 %v1039, 7
        %v1041 = vsub.s32 0, %v1040
        %v1042 = vrot.slane %v1037, %v1041
        %v1060 = vunpack.c.l.b16 %v1021
        %v1061 = vunpack.c.l.b16 %v1022
        %v1062 = vunpack.c.l.b16 %v1023
        %v1063 = vunpack.c.l.b16 %v1024
        %v1064 = vunpack.c.l.b16 %v1025
        %v1065 = vunpack.c.l.b16 %v1026
        %v1066 = vunpack.c.l.b16 %v1027
        %v1067 = vunpack.c.l.b16 %v1028
        %v1068 = vunpack.c.l.b16 %v1029
        %v1069 = vunpack.c.l.b16 %v1030
        %v1070 = vunpack.c.l.b16 %v1031
        %v1071 = vunpack.c.l.b16 %v1032
        %v1072 = vunpack.c.l.b16 %v1033
        %v1073 = vunpack.c.l.b16 %v1034
        %v1074 = vunpack.c.l.b16 %v1035
        %v1075 = vunpack.c.l.b16 %v1036
        %v1076 = vpack.c.b16 %v1061, %v1060
        %v1077 = vpack.c.b16 %v1063, %v1062
        %v1078 = vpack.c.b16 %v1065, %v1064
        %v1079 = vpack.c.b16 %v1067, %v1066
        %v1080 = vpack.c.b16 %v1069, %v1068
        %v1081 = vpack.c.b16 %v1071, %v1070
        %v1082 = vpack.c.b16 %v1073, %v1072
        %v1083 = vpack.c.b16 %v1075, %v1074
        %1092 = vmatprep.subr.bf16.mxu0 0
        %1093 = vmatpush1.bf16.msra.mxu0 %v1076
        %1094 = vmatprep.subr.bf16.mxu0 0
        %1095 = vmatpush1.bf16.msra.mxu0 %v1077
        %1096 = vmatprep.subr.bf16.mxu0 0
        %1097 = vmatpush1.bf16.msra.mxu0 %v1078
        %1098 = vmatprep.subr.bf16.mxu0 0
        %1099 = vmatpush1.bf16.msra.mxu0 %v1079
        %1100 = vmatprep.subr.bf16.mxu0 0
        %1101 = vmatpush1.bf16.msra.mxu0 %v1080
        %1102 = vmatprep.subr.bf16.mxu0 0
        %1103 = vmatpush1.bf16.msra.mxu0 %v1081
        %1104 = vmatprep.subr.bf16.mxu0 0
        %1105 = vmatpush1.bf16.msra.mxu0 %v1082
        %1106 = vmatprep.subr.bf16.mxu0 0
        %1107 = vmatpush1.bf16.msra.mxu0 %v1083
        %1108 = vmatprep.subr.bf16.mxu0 0
        %1109 = vmatpush1.bf16.msra.mxu0 0
        %1110 = vmatprep.subr.bf16.mxu0 0
        %1111 = vmatpush1.bf16.msra.mxu0 0
        %1112 = vmatprep.subr.bf16.mxu0 0
        %1113 = vmatpush1.bf16.msra.mxu0 0
        %1114 = vmatprep.subr.bf16.mxu0 0
        %1115 = vmatpush1.bf16.msra.mxu0 0
        %1116 = vmatprep.subr.bf16.mxu0 0
        %1117 = vmatpush1.bf16.msra.mxu0 0
        %1118 = vmatprep.subr.bf16.mxu0 0
        %1119 = vmatpush1.bf16.msra.mxu0 0
        %1120 = vmatprep.subr.bf16.mxu0 0
        %1121 = vmatpush1.bf16.msra.mxu0 0
        %1122 = vmatprep.subr.bf16.mxu0 0
        %1123 = vmatpush1.bf16.msra.mxu0 0
        %1124 = vmatprep.mubr.bf16.mxu0 0
        %1125 = vmatmul.mubr.bf16.gmra.mrb[0].mxu0 %v796
        %v1126 = vpop.f32.mrb[0].mxu0
        %v1127 = vadd.f32 %v1042, %v1126
        %v1128 = vpop.f32.mrb[0].mxu0
        %v1129 = vpop.f32.mrb[0].mxu0
        %v1130 = vadd.f32 %v1042, %v1129
        %v1131 = vpop.f32.mrb[0].mxu0
        %1132 = vdwg.mxu0
        %v1133 = vpack.c.bf16 %v906, %v903
        %v1134 = vpack.c.bf16 %v1018, %v1015
        %1135 = vmatprep.subr.bf16.mxu0 0
        %1136 = vmatpush1.bf16.xpose.msra.mxu0 %v1134
        %1137 = vmatprep.subr.bf16.mxu0 0
        %1138 = vmatpush1.bf16.xpose.msra.mxu0 0
        %1139 = vmatprep.subr.bf16.mxu0 0
        %1140 = vmatpush1.bf16.xpose.msra.mxu0 0
        %1141 = vmatprep.subr.bf16.mxu0 0
        %1142 = vmatpush1.bf16.xpose.msra.mxu0 0
        %1143 = vmatprep.subr.bf16.mxu0 0
        %1144 = vmatpush1.bf16.xpose.msra.mxu0 0
        %1145 = vmatprep.subr.bf16.mxu0 0
        %1146 = vmatpush1.bf16.xpose.msra.mxu0 0
        %1147 = vmatprep.subr.bf16.mxu0 0
        %1148 = vmatpush1.bf16.xpose.msra.mxu0 0
        %1149 = vmatprep.subr.bf16.mxu0 0
        %1150 = vmatpush1.bf16.xpose.msra.mxu0 0
        %1151 = vmatprep.subr.bf16.mxu0 0
        %1152 = vmatpush1.bf16.xpose.msra.mxu0 0
        %1153 = vmatprep.subr.bf16.mxu0 0
        %1154 = vmatpush1.bf16.xpose.msra.mxu0 0
        %1155 = vmatprep.subr.bf16.mxu0 0
        %1156 = vmatpush1.bf16.xpose.msra.mxu0 0
        %1157 = vmatprep.subr.bf16.mxu0 0
        %1158 = vmatpush1.bf16.xpose.msra.mxu0 0
        %1159 = vmatprep.subr.bf16.mxu0 0
        %1160 = vmatpush1.bf16.xpose.msra.mxu0 0
        %1161 = vmatprep.subr.bf16.mxu0 0
        %1162 = vmatpush1.bf16.xpose.msra.mxu0 0
        %1163 = vmatprep.subr.bf16.mxu0 0
        %1164 = vmatpush1.bf16.xpose.msra.mxu0 0
        %1165 = vmatprep.subr.bf16.mxu0 0
        %1166 = vmatpush1.bf16.xpose.msra.mxu0 0
        %1167 = vmatprep.mubr.bf16.mxu0 0
        %1168 = vmatmul.mubr.bf16.gmra.mrb[0].mxu0 %v1133
        %v1169 = vpop.f32.mrb[0].mxu0
        %v1170 = vadd.f32 0.0, %v1169
        %v1171 = vpop.f32.mrb[0].mxu0
        %v1172 = vpop.f32.mrb[0].mxu0
        %v1173 = vadd.f32 0.0, %v1172
        %v1174 = vpop.f32.mrb[0].mxu0
        %1175 = vdwg.mxu0
        %v1176 = vmul.f32 %v1170, 0.088388346
        %v1177 = vmul.f32 %v1173, 0.088388346
        %v1178 = vld [vmem:[%s2] sm:$0xff]
        %v1179 = vld [vmem:[%s2 + $0x8] sm:$0xff]
        %v1180 = vadd.f32 %v1176, %v1178
        %v1181 = vadd.f32 %v1177, %v1179
        %vm1182 = vcmask 130048
        %v1183 = vsel %vm1182, %v1180, -inf
        %1184 = vmax.xlane.f32.xlu0 %v1183
        %v1185 = vpop.xlane.xlu0 %1184
        %v1186 = vsel %vm1182, %v1181, -inf
        %1187 = vmax.xlane.f32.xlu0 %v1186
        %v1188 = vpop.xlane.xlu0 %1187
        %v1189 = vsub.f32 %v1180, %v1185
        %v1190 = vsub.f32 %v1181, %v1188
        %v1191 = vmul.f32 %v1189, 1.442695
        %v1192 = vpow.pop %v1191
        %v1193 = vmul.f32 %v1190, 1.442695
        %v1194 = vpow.pop %v1193
        %v1195 = vsel %vm1182, %v1192, 0.0
        %1196 = vadd.xlane.f32.xlu0 %v1195
        %v1197 = vpop.xlane.xlu0 %1196
        %v1198 = vsel %vm1182, %v1194, 0.0
        %1199 = vadd.xlane.f32.xlu0 %v1198
        %v1200 = vpop.xlane.xlu0 %1199
        %v1201 = vrcp.pop %v1197
        %v1202 = vrcp.pop %v1200
        %v1203 = vmul.f32 %v1192, %v1201
        %v1204 = vmul.f32 %v1194, %v1202
        %v1205 = vpack.c.bf16 %v1204, %v1203
        %v1206 = vpack.c.bf16 %v1130, %v1127
        %v1208 = vsel %vm1182, %v1205, 0
        %1210 = vmatprep.subr.bf16.mxu0 0
        %1211 = vmatpush1.bf16.msra.mxu0 %v1206
        %1212 = vmatprep.subr.bf16.mxu0 0
        %1213 = vmatpush1.bf16.msra.mxu0 0
        %1214 = vmatprep.subr.bf16.mxu0 0
        %1215 = vmatpush1.bf16.msra.mxu0 0
        %1216 = vmatprep.subr.bf16.mxu0 0
        %1217 = vmatpush1.bf16.msra.mxu0 0
        %1218 = vmatprep.subr.bf16.mxu0 0
        %1219 = vmatpush1.bf16.msra.mxu0 0
        %1220 = vmatprep.subr.bf16.mxu0 0
        %1221 = vmatpush1.bf16.msra.mxu0 0
        %1222 = vmatprep.subr.bf16.mxu0 0
        %1223 = vmatpush1.bf16.msra.mxu0 0
        %1224 = vmatprep.subr.bf16.mxu0 0
        %1225 = vmatpush1.bf16.msra.mxu0 0
        %1226 = vmatprep.subr.bf16.mxu0 0
        %1227 = vmatpush1.bf16.msra.mxu0 0
        %1228 = vmatprep.subr.bf16.mxu0 0
        %1229 = vmatpush1.bf16.msra.mxu0 0
        %1230 = vmatprep.subr.bf16.mxu0 0
        %1231 = vmatpush1.bf16.msra.mxu0 0
        %1232 = vmatprep.subr.bf16.mxu0 0
        %1233 = vmatpush1.bf16.msra.mxu0 0
        %1234 = vmatprep.subr.bf16.mxu0 0
        %1235 = vmatpush1.bf16.msra.mxu0 0
        %1236 = vmatprep.subr.bf16.mxu0 0
        %1237 = vmatpush1.bf16.msra.mxu0 0
        %1238 = vmatprep.subr.bf16.mxu0 0
        %1239 = vmatpush1.bf16.msra.mxu0 0
        %1240 = vmatprep.subr.bf16.mxu0 0
        %1241 = vmatpush1.bf16.msra.mxu0 0
        %1242 = vmatprep.mubr.bf16.mxu0 0
        %1243 = vmatmul.mubr.bf16.gmra.mrb[0].mxu0 %v1208
        %v1244 = vpop.f32.mrb[0].mxu0
        %v1245 = vadd.f32 0.0, %v1244
        %v1246 = vpop.f32.mrb[0].mxu0
        %v1247 = vpop.f32.mrb[0].mxu0
        %v1248 = vadd.f32 0.0, %v1247
        %v1249 = vpop.f32.mrb[0].mxu0
        %1250 = vdwg.mxu0
        %v1251 = vpack.c.bf16 %v1248, %v1245
        %v1252 = vld [vmem:[#allocation2] sm:$0xf]
        %v1253 = vld [vmem:[#allocation2 + $0x4] sm:$0xf]
        %v1254 = vld [vmem:[#allocation2 + $0x8] sm:$0xf]
        %v1255 = vld [vmem:[#allocation2 + $0xc] sm:$0xf]
        %v1256 = vld [vmem:[#allocation2 + $0x10] sm:$0xf]
        %v1257 = vld [vmem:[#allocation2 + $0x14] sm:$0xf]
        %v1258 = vld [vmem:[#allocation2 + $0x18] sm:$0xf]
        %v1259 = vld [vmem:[#allocation2 + $0x1c] sm:$0xf]
        %v1260 = vld [vmem:[#allocation2 + $0x20] sm:$0xf]
        %v1261 = vld [vmem:[#allocation2 + $0x24] sm:$0xf]
        %v1262 = vld [vmem:[#allocation2 + $0x28] sm:$0xf]
        %v1263 = vld [vmem:[#allocation2 + $0x2c] sm:$0xf]
        %v1264 = vld [vmem:[#allocation2 + $0x30] sm:$0xf]
        %v1265 = vld [vmem:[#allocation2 + $0x34] sm:$0xf]
        %v1266 = vld [vmem:[#allocation2 + $0x38] sm:$0xf]
        %v1267 = vld [vmem:[#allocation2 + $0x3c] sm:$0xf]
        %v1268 = vld [vmem:[%s12] sm:$0x1]
        %v1270 = vlaneseq
        %v1271 = vshrl.u32 %v1270, 7
        %v1272 = vsub.s32 0, %v1271
        %v1273 = vrot.slane %v1268, %v1272
        %v1291 = vunpack.c.l.b16 %v1252
        %v1292 = vunpack.c.l.b16 %v1253
        %v1293 = vunpack.c.l.b16 %v1254
        %v1294 = vunpack.c.l.b16 %v1255
        %v1295 = vunpack.c.l.b16 %v1256
        %v1296 = vunpack.c.l.b16 %v1257
        %v1297 = vunpack.c.l.b16 %v1258
        %v1298 = vunpack.c.l.b16 %v1259
        %v1299 = vunpack.c.l.b16 %v1260
        %v1300 = vunpack.c.l.b16 %v1261
        %v1301 = vunpack.c.l.b16 %v1262
        %v1302 = vunpack.c.l.b16 %v1263
        %v1303 = vunpack.c.l.b16 %v1264
        %v1304 = vunpack.c.l.b16 %v1265
        %v1305 = vunpack.c.l.b16 %v1266
        %v1306 = vunpack.c.l.b16 %v1267
        %v1307 = vpack.c.b16 %v1292, %v1291
        %v1308 = vpack.c.b16 %v1294, %v1293
        %v1309 = vpack.c.b16 %v1296, %v1295
        %v1310 = vpack.c.b16 %v1298, %v1297
        %v1311 = vpack.c.b16 %v1300, %v1299
        %v1312 = vpack.c.b16 %v1302, %v1301
        %v1313 = vpack.c.b16 %v1304, %v1303
        %v1314 = vpack.c.b16 %v1306, %v1305
        %1323 = vmatprep.subr.bf16.mxu0 0
        %1324 = vmatpush1.bf16.msra.mxu0 %v1307
        %1325 = vmatprep.subr.bf16.mxu0 0
        %1326 = vmatpush1.bf16.msra.mxu0 %v1308
        %1327 = vmatprep.subr.bf16.mxu0 0
        %1328 = vmatpush1.bf16.msra.mxu0 %v1309
        %1329 = vmatprep.subr.bf16.mxu0 0
        %1330 = vmatpush1.bf16.msra.mxu0 %v1310
        %1331 = vmatprep.subr.bf16.mxu0 0
        %1332 = vmatpush1.bf16.msra.mxu0 %v1311
        %1333 = vmatprep.subr.bf16.mxu0 0
        %1334 = vmatpush1.bf16.msra.mxu0 %v1312
        %1335 = vmatprep.subr.bf16.mxu0 0
        %1336 = vmatpush1.bf16.msra.mxu0 %v1313
        %1337 = vmatprep.subr.bf16.mxu0 0
        %1338 = vmatpush1.bf16.msra.mxu0 %v1314
        %1339 = vmatprep.subr.bf16.mxu0 0
        %1340 = vmatpush1.bf16.msra.mxu0 0
        %1341 = vmatprep.subr.bf16.mxu0 0
        %1342 = vmatpush1.bf16.msra.mxu0 0
        %1343 = vmatprep.subr.bf16.mxu0 0
        %1344 = vmatpush1.bf16.msra.mxu0 0
        %1345 = vmatprep.subr.bf16.mxu0 0
        %1346 = vmatpush1.bf16.msra.mxu0 0
        %1347 = vmatprep.subr.bf16.mxu0 0
        %1348 = vmatpush1.bf16.msra.mxu0 0
        %1349 = vmatprep.subr.bf16.mxu0 0
        %1350 = vmatpush1.bf16.msra.mxu0 0
        %1351 = vmatprep.subr.bf16.mxu0 0
        %1352 = vmatpush1.bf16.msra.mxu0 0
        %1353 = vmatprep.subr.bf16.mxu0 0
        %1354 = vmatpush1.bf16.msra.mxu0 0
        %1355 = vmatprep.mubr.bf16.mxu0 0
        %1356 = vmatmul.mubr.bf16.gmra.mrb[0].mxu0 %v1251
        %v1357 = vpop.f32.mrb[0].mxu0
        %v1358 = vadd.f32 %v1273, %v1357
        %v1359 = vpop.f32.mrb[0].mxu0
        %v1360 = vpop.f32.mrb[0].mxu0
        %v1361 = vadd.f32 %v1273, %v1360
        %v1362 = vpop.f32.mrb[0].mxu0
        %1363 = vdwg.mxu0
        %v1364 = vadd.f32 %v753, %v1358
        %v1365 = vadd.f32 %v754, %v1361
        %v1366 = vld [vmem:[%s13] sm:$0x1]
        %v1367 = vld [vmem:[%s14] sm:$0x1]
        %1368 = vadd.xlane.f32.xlu0 %v1364
        %v1369 = vpop.xlane.xlu0 %1368
        %1370 = vadd.xlane.f32.xlu0 %v1365
        %v1371 = vpop.xlane.xlu0 %1370
        %v1372 = vmul.f32 %v1369, %v761
        %v1373 = vmul.f32 %v1371, %v761
        %v1374 = vsub.f32 %v1364, %v1372
        %v1375 = vsub.f32 %v1365, %v1373
        %v1376 = vmul.f32 %v1374, %v1374
        %v1377 = vmul.f32 %v1375, %v1375
        %1378 = vadd.xlane.f32.xlu0 %v1376
        %v1379 = vpop.xlane.xlu0 %1378
        %1380 = vadd.xlane.f32.xlu0 %v1377
        %v1381 = vpop.xlane.xlu0 %1380
        %v1382 = vmul.f32 %v1379, %v761
        %v1383 = vmul.f32 %v1381, %v761
        %v1384 = vadd.f32 %v1382, 1e-05
        %v1385 = vadd.f32 %v1383, 1e-05
        %v1386 = vrsqrt.pop %v1384
        %v1387 = vrsqrt.pop %v1385
        %v1388 = vmul.f32 %v1374, %v1386
        %v1389 = vmul.f32 %v1375, %v1387
        %v1391 = vlaneseq
        %v1392 = vshrl.u32 %v1391, 7
        %v1393 = vsub.s32 0, %v1392
        %v1394 = vrot.slane %v1366, %v1393
        %v1396 = vmul.f32 %v1388, %v1394
        %v1397 = vmul.f32 %v1389, %v1394
        %v1399 = vlaneseq
        %v1400 = vshrl.u32 %v1399, 7
        %v1401 = vsub.s32 0, %v1400
        %v1402 = vrot.slane %v1367, %v1401
        %v1404 = vadd.f32 %v1396, %v1402
        %v1405 = vadd.f32 %v1397, %v1402
        %v1406 = vpack.c.bf16 %v1405, %v1404
        %v1407 = vld [vmem:[%s15] sm:$0xff]
        %v1408 = vld [vmem:[%s15 + $0x8] sm:$0xff]
        %v1409 = vld [vmem:[%s15 + $0x10] sm:$0xff]
        %v1410 = vld [vmem:[%s15 + $0x18] sm:$0xff]
        %v1411 = vld [vmem:[%s15 + $0x20] sm:$0xff]
        %v1412 = vld [vmem:[%s15 + $0x28] sm:$0xff]
        %v1413 = vld [vmem:[%s15 + $0x30] sm:$0xff]
        %v1414 = vld [vmem:[%s15 + $0x38] sm:$0xff]
        %v1415 = vld [vmem:[%s15 + $0x40] sm:$0xff]
        %v1416 = vld [vmem:[%s15 + $0x48] sm:$0xff]
        %v1417 = vld [vmem:[%s15 + $0x50] sm:$0xff]
        %v1418 = vld [vmem:[%s15 + $0x58] sm:$0xff]
        %v1419 = vld [vmem:[%s15 + $0x60] sm:$0xff]
        %v1420 = vld [vmem:[%s15 + $0x68] sm:$0xff]
        %v1421 = vld [vmem:[%s15 + $0x70] sm:$0xff]
        %v1422 = vld [vmem:[%s15 + $0x78] sm:$0xff]
        %v1423 = vld [vmem:[%s15 + $0x80] sm:$0xff]
        %v1424 = vld [vmem:[%s15 + $0x88] sm:$0xff]
        %v1425 = vld [vmem:[%s15 + $0x90] sm:$0xff]
        %v1426 = vld [vmem:[%s15 + $0x98] sm:$0xff]
        %v1427 = vld [vmem:[%s15 + $0xa0] sm:$0xff]
        %v1428 = vld [vmem:[%s15 + $0xa8] sm:$0xff]
        %v1429 = vld [vmem:[%s15 + $0xb0] sm:$0xff]
        %v1430 = vld [vmem:[%s15 + $0xb8] sm:$0xff]
        %v1431 = vld [vmem:[%s15 + $0xc0] sm:$0xff]
        %v1432 = vld [vmem:[%s15 + $0xc8] sm:$0xff]
        %v1433 = vld [vmem:[%s15 + $0xd0] sm:$0xff]
        %v1434 = vld [vmem:[%s15 + $0xd8] sm:$0xff]
        %v1435 = vld [vmem:[%s15 + $0xe0] sm:$0xff]
        %v1436 = vld [vmem:[%s15 + $0xe8] sm:$0xff]
        %v1437 = vld [vmem:[%s15 + $0xf0] sm:$0xff]
        %v1438 = vld [vmem:[%s15 + $0xf8] sm:$0xff]
        %v1439 = vld [vmem:[%s16] sm:$0xf]
        %v1441 = vlaneseq
        %v1442 = vshrl.u32 %v1441, 7
        %v1443 = vsub.s32 0, %v1442
        %v1444 = vrot.slane %v1439, %v1443
        %v1445 = vlaneseq
        %v1446 = vshrl.u32 %v1445, 7
        %v1447 = vsub.s32 1, %v1446
        %v1448 = vrot.slane %v1439, %v1447
        %v1449 = vlaneseq
        %v1450 = vshrl.u32 %v1449, 7
        %v1451 = vsub.s32 2, %v1450
        %v1452 = vrot.slane %v1439, %v1451
        %v1453 = vlaneseq
        %v1454 = vshrl.u32 %v1453, 7
        %v1455 = vsub.s32 3, %v1454
        %v1456 = vrot.slane %v1439, %v1455
        %v1493 = vunpack.c.l.b16 %v1407
        %v1494 = vunpack.c.h.b16 %v1407
        %v1495 = vunpack.c.l.b16 %v1408
        %v1496 = vunpack.c.h.b16 %v1408
        %v1497 = vunpack.c.l.b16 %v1409
        %v1498 = vunpack.c.h.b16 %v1409
        %v1499 = vunpack.c.l.b16 %v1410
        %v1500 = vunpack.c.h.b16 %v1410
        %v1501 = vunpack.c.l.b16 %v1411
        %v1502 = vunpack.c.h.b16 %v1411
        %v1503 = vunpack.c.l.b16 %v1412
        %v1504 = vunpack.c.h.b16 %v1412
        %v1505 = vunpack.c.l.b16 %v1413
        %v1506 = vunpack.c.h.b16 %v1413
        %v1507 = vunpack.c.l.b16 %v1414
        %v1508 = vunpack.c.h.b16 %v1414
        %v1509 = vunpack.c.l.b16 %v1415
        %v1510 = vunpack.c.h.b16 %v1415
        %v1511 = vunpack.c.l.b16 %v1416
        %v1512 = vunpack.c.h.b16 %v1416
        %v1513 = vunpack.c.l.b16 %v1417
        %v1514 = vunpack.c.h.b16 %v1417
        %v1515 = vunpack.c.l.b16 %v1418
        %v1516 = vunpack.c.h.b16 %v1418
        %v1517 = vunpack.c.l.b16 %v1419
        %v1518 = vunpack.c.h.b16 %v1419
        %v1519 = vunpack.c.l.b16 %v1420
        %v1520 = vunpack.c.h.b16 %v1420
        %v1521 = vunpack.c.l.b16 %v1421
        %v1522 = vunpack.c.h.b16 %v1421
        %v1523 = vunpack.c.l.b16 %v1422
        %v1524 = vunpack.c.h.b16 %v1422
        %v1525 = vunpack.c.l.b16 %v1423
        %v1526 = vunpack.c.h.b16 %v1423
        %v1527 = vunpack.c.l.b16 %v1424
        %v1528 = vunpack.c.h.b16 %v1424
        %v1529 = vunpack.c.l.b16 %v1425
        %v1530 = vunpack.c.h.b16 %v1425
        %v1531 = vunpack.c.l.b16 %v1426
        %v1532 = vunpack.c.h.b16 %v1426
        %v1533 = vunpack.c.l.b16 %v1427
        %v1534 = vunpack.c.h.b16 %v1427
        %v1535 = vunpack.c.l.b16 %v1428
        %v1536 = vunpack.c.h.b16 %v1428
        %v1537 = vunpack.c.l.b16 %v1429
        %v1538 = vunpack.c.h.b16 %v1429
        %v1539 = vunpack.c.l.b16 %v1430
        %v1540 = vunpack.c.h.b16 %v1430
        %v1541 = vunpack.c.l.b16 %v1431
        %v1542 = vunpack.c.h.b16 %v1431
        %v1543 = vunpack.c.l.b16 %v1432
        %v1544 = vunpack.c.h.b16 %v1432
        %v1545 = vunpack.c.l.b16 %v1433
        %v1546 = vunpack.c.h.b16 %v1433
        %v1547 = vunpack.c.l.b16 %v1434
        %v1548 = vunpack.c.h.b16 %v1434
        %v1549 = vunpack.c.l.b16 %v1435
        %v1550 = vunpack.c.h.b16 %v1435
        %v1551 = vunpack.c.l.b16 %v1436
        %v1552 = vunpack.c.h.b16 %v1436
        %v1553 = vunpack.c.l.b16 %v1437
        %v1554 = vunpack.c.h.b16 %v1437
        %v1555 = vunpack.c.l.b16 %v1438
        %v1556 = vunpack.c.h.b16 %v1438
        %v1557 = vpack.c.b16 %v1497, %v1493
        %v1558 = vpack.c.b16 %v1498, %v1494
        %v1559 = vpack.c.b16 %v1499, %v1495
        %v1560 = vpack.c.b16 %v1500, %v1496
        %v1561 = vpack.c.b16 %v1505, %v1501
        %v1562 = vpack.c.b16 %v1506, %v1502
        %v1563 = vpack.c.b16 %v1507, %v1503
        %v1564 = vpack.c.b16 %v1508, %v1504
        %v1565 = vpack.c.b16 %v1513, %v1509
        %v1566 = vpack.c.b16 %v1514, %v1510
        %v1567 = vpack.c.b16 %v1515, %v1511
        %v1568 = vpack.c.b16 %v1516, %v1512
        %v1569 = vpack.c.b16 %v1521, %v1517
        %v1570 = vpack.c.b16 %v1522, %v1518
        %v1571 = vpack.c.b16 %v1523, %v1519
        %v1572 = vpack.c.b16 %v1524, %v1520
        %v1573 = vpack.c.b16 %v1529, %v1525
        %v1574 = vpack.c.b16 %v1530, %v1526
        %v1575 = vpack.c.b16 %v1531, %v1527
        %v1576 = vpack.c.b16 %v1532, %v1528
        %v1577 = vpack.c.b16 %v1537, %v1533
        %v1578 = vpack.c.b16 %v1538, %v1534
        %v1579 = vpack.c.b16 %v1539, %v1535
        %v1580 = vpack.c.b16 %v1540, %v1536
        %v1581 = vpack.c.b16 %v1545, %v1541
        %v1582 = vpack.c.b16 %v1546, %v1542
        %v1583 = vpack.c.b16 %v1547, %v1543
        %v1584 = vpack.c.b16 %v1548, %v1544
        %v1585 = vpack.c.b16 %v1553, %v1549
        %v1586 = vpack.c.b16 %v1554, %v1550
        %v1587 = vpack.c.b16 %v1555, %v1551
        %v1588 = vpack.c.b16 %v1556, %v1552
        %1621 = vmatprep.subr.bf16.mxu0 %v1558
        %1622 = vmatpush1.bf16.msra.mxu0 %v1557
        %1623 = vmatprep.subr.bf16.mxu0 %v1562
        %1624 = vmatpush1.bf16.msra.mxu0 %v1561
        %1625 = vmatprep.subr.bf16.mxu0 %v1566
        %1626 = vmatpush1.bf16.msra.mxu0 %v1565
        %1627 = vmatprep.subr.bf16.mxu0 %v1570
        %1628 = vmatpush1.bf16.msra.mxu0 %v1569
        %1629 = vmatprep.subr.bf16.mxu0 %v1574
        %1630 = vmatpush1.bf16.msra.mxu0 %v1573
        %1631 = vmatprep.subr.bf16.mxu0 %v1578
        %1632 = vmatpush1.bf16.msra.mxu0 %v1577
        %1633 = vmatprep.subr.bf16.mxu0 %v1582
        %1634 = vmatpush1.bf16.msra.mxu0 %v1581
        %1635 = vmatprep.subr.bf16.mxu0 %v1586
        %1636 = vmatpush1.bf16.msra.mxu0 %v1585
        %1637 = vmatprep.subr.bf16.mxu0 0
        %1638 = vmatpush1.bf16.msra.mxu0 0
        %1639 = vmatprep.subr.bf16.mxu0 0
        %1640 = vmatpush1.bf16.msra.mxu0 0
        %1641 = vmatprep.subr.bf16.mxu0 0
        %1642 = vmatpush1.bf16.msra.mxu0 0
        %1643 = vmatprep.subr.bf16.mxu0 0
        %1644 = vmatpush1.bf16.msra.mxu0 0
        %1645 = vmatprep.subr.bf16.mxu0 0
        %1646 = vmatpush1.bf16.msra.mxu0 0
        %1647 = vmatprep.subr.bf16.mxu0 0
        %1648 = vmatpush1.bf16.msra.mxu0 0
        %1649 = vmatprep.subr.bf16.mxu0 0
        %1650 = vmatpush1.bf16.msra.mxu0 0
        %1651 = vmatprep.subr.bf16.mxu0 0
        %1652 = vmatpush1.bf16.msra.mxu0 0
        %1653 = vmatprep.mubr.bf16.mxu0 0
        %1654 = vmatmul.mubr.bf16.gmra.mrb[0].mxu0 %v1406
        %v1655 = vpop.f32.mrb[0].mxu0
        %v1656 = vadd.f32 %v1444, %v1655
        %v1657 = vpop.f32.mrb[0].mxu0
        %v1658 = vadd.f32 %v1448, %v1657
        %v1659 = vpop.f32.mrb[0].mxu0
        %v1660 = vadd.f32 %v1444, %v1659
        %v1661 = vpop.f32.mrb[0].mxu0
        %v1662 = vadd.f32 %v1448, %v1661
        %1663 = vdwg.mxu0
        %1664 = vmatprep.subr.bf16.mxu0 %v1560
        %1665 = vmatpush1.bf16.msra.mxu0 %v1559
        %1666 = vmatprep.subr.bf16.mxu0 %v1564
        %1667 = vmatpush1.bf16.msra.mxu0 %v1563
        %1668 = vmatprep.subr.bf16.mxu0 %v1568
        %1669 = vmatpush1.bf16.msra.mxu0 %v1567
        %1670 = vmatprep.subr.bf16.mxu0 %v1572
        %1671 = vmatpush1.bf16.msra.mxu0 %v1571
        %1672 = vmatprep.subr.bf16.mxu0 %v1576
        %1673 = vmatpush1.bf16.msra.mxu0 %v1575
        %1674 = vmatprep.subr.bf16.mxu0 %v1580
        %1675 = vmatpush1.bf16.msra.mxu0 %v1579
        %1676 = vmatprep.subr.bf16.mxu0 %v1584
        %1677 = vmatpush1.bf16.msra.mxu0 %v1583
        %1678 = vmatprep.subr.bf16.mxu0 %v1588
        %1679 = vmatpush1.bf16.msra.mxu0 %v1587
        %1680 = vmatprep.subr.bf16.mxu0 0
        %1681 = vmatpush1.bf16.msra.mxu0 0
        %1682 = vmatprep.subr.bf16.mxu0 0
        %1683 = vmatpush1.bf16.msra.mxu0 0
        %1684 = vmatprep.subr.bf16.mxu0 0
        %1685 = vmatpush1.bf16.msra.mxu0 0
        %1686 = vmatprep.subr.bf16.mxu0 0
        %1687 = vmatpush1.bf16.msra.mxu0 0
        %1688 = vmatprep.subr.bf16.mxu0 0
        %1689 = vmatpush1.bf16.msra.mxu0 0
        %1690 = vmatprep.subr.bf16.mxu0 0
        %1691 = vmatpush1.bf16.msra.mxu0 0
        %1692 = vmatprep.subr.bf16.mxu0 0
        %1693 = vmatpush1.bf16.msra.mxu0 0
        %1694 = vmatprep.subr.bf16.mxu0 0
        %1695 = vmatpush1.bf16.msra.mxu0 0
        %1696 = vmatprep.mubr.bf16.mxu0 0
        %1697 = vmatmul.mubr.bf16.gmra.mrb[0].mxu0 %v1406
        %v1698 = vpop.f32.mrb[0].mxu0
        %v1699 = vadd.f32 %v1452, %v1698
        %v1700 = vpop.f32.mrb[0].mxu0
        %v1701 = vadd.f32 %v1456, %v1700
        %v1702 = vpop.f32.mrb[0].mxu0
        %v1703 = vadd.f32 %v1452, %v1702
        %v1704 = vpop.f32.mrb[0].mxu0
        %v1705 = vadd.f32 %v1456, %v1704
        %1706 = vdwg.mxu0
        %v1707 = vmul.f32 %v1656, %v1656
        %v1708 = vmul.f32 %v1658, %v1658
        %v1709 = vmul.f32 %v1699, %v1699
        %v1710 = vmul.f32 %v1701, %v1701
        %v1711 = vmul.f32 %v1660, %v1660
        %v1712 = vmul.f32 %v1662, %v1662
        %v1713 = vmul.f32 %v1703, %v1703
        %v1714 = vmul.f32 %v1705, %v1705
        %v1715 = vmul.f32 %v1656, %v1707
        %v1716 = vmul.f32 %v1658, %v1708
        %v1717 = vmul.f32 %v1699, %v1709
        %v1718 = vmul.f32 %v1701, %v1710
        %v1719 = vmul.f32 %v1660, %v1711
        %v1720 = vmul.f32 %v1662, %v1712
        %v1721 = vmul.f32 %v1703, %v1713
        %v1722 = vmul.f32 %v1705, %v1714
        %v1723 = vmul.f32 %v1715, 0.044715
        %v1724 = vmul.f32 %v1716, 0.044715
        %v1725 = vmul.f32 %v1717, 0.044715
        %v1726 = vmul.f32 %v1718, 0.044715
        %v1727 = vmul.f32 %v1719, 0.044715
        %v1728 = vmul.f32 %v1720, 0.044715
        %v1729 = vmul.f32 %v1721, 0.044715
        %v1730 = vmul.f32 %v1722, 0.044715
        %v1731 = vadd.f32 %v1656, %v1723
        %v1732 = vadd.f32 %v1658, %v1724
        %v1733 = vadd.f32 %v1699, %v1725
        %v1734 = vadd.f32 %v1701, %v1726
        %v1735 = vadd.f32 %v1660, %v1727
        %v1736 = vadd.f32 %v1662, %v1728
        %v1737 = vadd.f32 %v1703, %v1729
        %v1738 = vadd.f32 %v1705, %v1730
        %v1739 = vmul.f32 %v1731, 0.7978846
        %v1740 = vmul.f32 %v1732, 0.7978846
        %v1741 = vmul.f32 %v1733, 0.7978846
        %v1742 = vmul.f32 %v1734, 0.7978846
        %v1743 = vmul.f32 %v1735, 0.7978846
        %v1744 = vmul.f32 %v1736, 0.7978846
        %v1745 = vmul.f32 %v1737, 0.7978846
        %v1746 = vmul.f32 %v1738, 0.7978846
        %v1747 = vtanh.pop %v1739
        %v1748 = vtanh.pop %v1740
        %v1749 = vtanh.pop %v1741
        %v1750 = vtanh.pop %v1742
        %v1751 = vtanh.pop %v1743
        %v1752 = vtanh.pop %v1744
        %v1753 = vtanh.pop %v1745
        %v1754 = vtanh.pop %v1746
        %v1755 = vadd.f32 %v1747, 1.0
        %v1756 = vadd.f32 %v1748, 1.0
        %v1757 = vadd.f32 %v1749, 1.0
        %v1758 = vadd.f32 %v1750, 1.0
        %v1759 = vadd.f32 %v1751, 1.0
        %v1760 = vadd.f32 %v1752, 1.0
        %v1761 = vadd.f32 %v1753, 1.0
        %v1762 = vadd.f32 %v1754, 1.0
        %v1763 = vmul.f32 %v1755, 0.5
        %v1764 = vmul.f32 %v1756, 0.5
        %v1765 = vmul.f32 %v1757, 0.5
        %v1766 = vmul.f32 %v1758, 0.5
        %v1767 = vmul.f32 %v1759, 0.5
        %v1768 = vmul.f32 %v1760, 0.5
        %v1769 = vmul.f32 %v1761, 0.5
        %v1770 = vmul.f32 %v1762, 0.5
        %v1771 = vmul.f32 %v1656, %v1763
        %v1772 = vmul.f32 %v1658, %v1764
        %v1773 = vmul.f32 %v1699, %v1765
        %v1774 = vmul.f32 %v1701, %v1766
        %v1775 = vmul.f32 %v1660, %v1767
        %v1776 = vmul.f32 %v1662, %v1768
        %v1777 = vmul.f32 %v1703, %v1769
        %v1778 = vmul.f32 %v1705, %v1770
        %v1779 = vpack.c.bf16 %v1775, %v1771
        %v1780 = vpack.c.bf16 %v1776, %v1772
        %v1781 = vpack.c.bf16 %v1777, %v1773
        %v1782 = vpack.c.bf16 %v1778, %v1774
        %v1783 = vld [vmem:[#allocation5] sm:$0xf]
        %v1784 = vld [vmem:[#allocation5 + $0x4] sm:$0xf]
        %v1785 = vld [vmem:[#allocation5 + $0x8] sm:$0xf]
        %v1786 = vld [vmem:[#allocation5 + $0xc] sm:$0xf]
        %v1787 = vld [vmem:[#allocation5 + $0x10] sm:$0xf]
        %v1788 = vld [vmem:[#allocation5 + $0x14] sm:$0xf]
        %v1789 = vld [vmem:[#allocation5 + $0x18] sm:$0xf]
        %v1790 = vld [vmem:[#allocation5 + $0x1c] sm:$0xf]
        %v1791 = vld [vmem:[#allocation5 + $0x20] sm:$0xf]
        %v1792 = vld [vmem:[#allocation5 + $0x24] sm:$0xf]
        %v1793 = vld [vmem:[#allocation5 + $0x28] sm:$0xf]
        %v1794 = vld [vmem:[#allocation5 + $0x2c] sm:$0xf]
        %v1795 = vld [vmem:[#allocation5 + $0x30] sm:$0xf]
        %v1796 = vld [vmem:[#allocation5 + $0x34] sm:$0xf]
        %v1797 = vld [vmem:[#allocation5 + $0x38] sm:$0xf]
        %v1798 = vld [vmem:[#allocation5 + $0x3c] sm:$0xf]
        %v1799 = vld [vmem:[#allocation5 + $0x40] sm:$0xf]
        %v1800 = vld [vmem:[#allocation5 + $0x44] sm:$0xf]
        %v1801 = vld [vmem:[#allocation5 + $0x48] sm:$0xf]
        %v1802 = vld [vmem:[#allocation5 + $0x4c] sm:$0xf]
        %v1803 = vld [vmem:[#allocation5 + $0x50] sm:$0xf]
        %v1804 = vld [vmem:[#allocation5 + $0x54] sm:$0xf]
        %v1805 = vld [vmem:[#allocation5 + $0x58] sm:$0xf]
        %v1806 = vld [vmem:[#allocation5 + $0x5c] sm:$0xf]
        %v1807 = vld [vmem:[#allocation5 + $0x60] sm:$0xf]
        %v1808 = vld [vmem:[#allocation5 + $0x64] sm:$0xf]
        %v1809 = vld [vmem:[#allocation5 + $0x68] sm:$0xf]
        %v1810 = vld [vmem:[#allocation5 + $0x6c] sm:$0xf]
        %v1811 = vld [vmem:[#allocation5 + $0x70] sm:$0xf]
        %v1812 = vld [vmem:[#allocation5 + $0x74] sm:$0xf]
        %v1813 = vld [vmem:[#allocation5 + $0x78] sm:$0xf]
        %v1814 = vld [vmem:[#allocation5 + $0x7c] sm:$0xf]
        %v1815 = vld [vmem:[#allocation5 + $0x80] sm:$0xf]
        %v1816 = vld [vmem:[#allocation5 + $0x84] sm:$0xf]
        %v1817 = vld [vmem:[#allocation5 + $0x88] sm:$0xf]
        %v1818 = vld [vmem:[#allocation5 + $0x8c] sm:$0xf]
        %v1819 = vld [vmem:[#allocation5 + $0x90] sm:$0xf]
        %v1820 = vld [vmem:[#allocation5 + $0x94] sm:$0xf]
        %v1821 = vld [vmem:[#allocation5 + $0x98] sm:$0xf]
        %v1822 = vld [vmem:[#allocation5 + $0x9c] sm:$0xf]
        %v1823 = vld [vmem:[#allocation5 + $0xa0] sm:$0xf]
        %v1824 = vld [vmem:[#allocation5 + $0xa4] sm:$0xf]
        %v1825 = vld [vmem:[#allocation5 + $0xa8] sm:$0xf]
        %v1826 = vld [vmem:[#allocation5 + $0xac] sm:$0xf]
        %v1827 = vld [vmem:[#allocation5 + $0xb0] sm:$0xf]
        %v1828 = vld [vmem:[#allocation5 + $0xb4] sm:$0xf]
        %v1829 = vld [vmem:[#allocation5 + $0xb8] sm:$0xf]
        %v1830 = vld [vmem:[#allocation5 + $0xbc] sm:$0xf]
        %v1831 = vld [vmem:[#allocation5 + $0xc0] sm:$0xf]
        %v1832 = vld [vmem:[#allocation5 + $0xc4] sm:$0xf]
        %v1833 = vld [vmem:[#allocation5 + $0xc8] sm:$0xf]
        %v1834 = vld [vmem:[#allocation5 + $0xcc] sm:$0xf]
        %v1835 = vld [vmem:[#allocation5 + $0xd0] sm:$0xf]
        %v1836 = vld [vmem:[#allocation5 + $0xd4] sm:$0xf]
        %v1837 = vld [vmem:[#allocation5 + $0xd8] sm:$0xf]
        %v1838 = vld [vmem:[#allocation5 + $0xdc] sm:$0xf]
        %v1839 = vld [vmem:[#allocation5 + $0xe0] sm:$0xf]
        %v1840 = vld [vmem:[#allocation5 + $0xe4] sm:$0xf]
        %v1841 = vld [vmem:[#allocation5 + $0xe8] sm:$0xf]
        %v1842 = vld [vmem:[#allocation5 + $0xec] sm:$0xf]
        %v1843 = vld [vmem:[#allocation5 + $0xf0] sm:$0xf]
        %v1844 = vld [vmem:[#allocation5 + $0xf4] sm:$0xf]
        %v1845 = vld [vmem:[#allocation5 + $0xf8] sm:$0xf]
        %v1846 = vld [vmem:[#allocation5 + $0xfc] sm:$0xf]
        %v1847 = vld [vmem:[%s18] sm:$0x1]
        %v1849 = vlaneseq
        %v1850 = vshrl.u32 %v1849, 7
        %v1851 = vsub.s32 0, %v1850
        %v1852 = vrot.slane %v1847, %v1851
        %v1918 = vunpack.c.l.b16 %v1783
        %v1919 = vunpack.c.l.b16 %v1784
        %v1920 = vunpack.c.l.b16 %v1785
        %v1921 = vunpack.c.l.b16 %v1786
        %v1922 = vunpack.c.l.b16 %v1787
        %v1923 = vunpack.c.l.b16 %v1788
        %v1924 = vunpack.c.l.b16 %v1789
        %v1925 = vunpack.c.l.b16 %v1790
        %v1926 = vunpack.c.l.b16 %v1791
        %v1927 = vunpack.c.l.b16 %v1792
        %v1928 = vunpack.c.l.b16 %v1793
        %v1929 = vunpack.c.l.b16 %v1794
        %v1930 = vunpack.c.l.b16 %v1795
        %v1931 = vunpack.c.l.b16 %v1796
        %v1932 = vunpack.c.l.b16 %v1797
        %v1933 = vunpack.c.l.b16 %v1798
        %v1934 = vunpack.c.l.b16 %v1799
        %v1935 = vunpack.c.l.b16 %v1800
        %v1936 = vunpack.c.l.b16 %v1801
        %v1937 = vunpack.c.l.b16 %v1802
        %v1938 = vunpack.c.l.b16 %v1803
        %v1939 = vunpack.c.l.b16 %v1804
        %v1940 = vunpack.c.l.b16 %v1805
        %v1941 = vunpack.c.l.b16 %v1806
        %v1942 = vunpack.c.l.b16 %v1807
        %v1943 = vunpack.c.l.b16 %v1808
        %v1944 = vunpack.c.l.b16 %v1809
        %v1945 = vunpack.c.l.b16 %v1810
        %v1946 = vunpack.c.l.b16 %v1811
        %v1947 = vunpack.c.l.b16 %v1812
        %v1948 = vunpack.c.l.b16 %v1813
        %v1949 = vunpack.c.l.b16 %v1814
        %v1950 = vunpack.c.l.b16 %v1815
        %v1951 = vunpack.c.l.b16 %v1816
        %v1952 = vunpack.c.l.b16 %v1817
        %v1953 = vunpack.c.l.b16 %v1818
        %v1954 = vunpack.c.l.b16 %v1819
        %v1955 = vunpack.c.l.b16 %v1820
        %v1956 = vunpack.c.l.b16 %v1821
        %v1957 = vunpack.c.l.b16 %v1822
        %v1958 = vunpack.c.l.b16 %v1823
        %v1959 = vunpack.c.l.b16 %v1824
        %v1960 = vunpack.c.l.b16 %v1825
        %v1961 = vunpack.c.l.b16 %v1826
        %v1962 = vunpack.c.l.b16 %v1827
        %v1963 = vunpack.c.l.b16 %v1828
        %v1964 = vunpack.c.l.b16 %v1829
        %v1965 = vunpack.c.l.b16 %v1830
        %v1966 = vunpack.c.l.b16 %v1831
        %v1967 = vunpack.c.l.b16 %v1832
        %v1968 = vunpack.c.l.b16 %v1833
        %v1969 = vunpack.c.l.b16 %v1834
        %v1970 = vunpack.c.l.b16 %v1835
        %v1971 = vunpack.c.l.b16 %v1836
        %v1972 = vunpack.c.l.b16 %v1837
        %v1973 = vunpack.c.l.b16 %v1838
        %v1974 = vunpack.c.l.b16 %v1839
        %v1975 = vunpack.c.l.b16 %v1840
        %v1976 = vunpack.c.l.b16 %v1841
        %v1977 = vunpack.c.l.b16 %v1842
        %v1978 = vunpack.c.l.b16 %v1843
        %v1979 = vunpack.c.l.b16 %v1844
        %v1980 = vunpack.c.l.b16 %v1845
        %v1981 = vunpack.c.l.b16 %v1846
        %v1982 = vpack.c.b16 %v1919, %v1918
        %v1983 = vpack.c.b16 %v1921, %v1920
        %v1984 = vpack.c.b16 %v1923, %v1922
        %v1985 = vpack.c.b16 %v1925, %v1924
        %v1986 = vpack.c.b16 %v1927, %v1926
        %v1987 = vpack.c.b16 %v1929, %v1928
        %v1988 = vpack.c.b16 %v1931, %v1930
        %v1989 = vpack.c.b16 %v1933, %v1932
        %v1990 = vpack.c.b16 %v1935, %v1934
        %v1991 = vpack.c.b16 %v1937, %v1936
        %v1992 = vpack.c.b16 %v1939, %v1938
        %v1993 = vpack.c.b16 %v1941, %v1940
        %v1994 = vpack.c.b16 %v1943, %v1942
        %v1995 = vpack.c.b16 %v1945, %v1944
        %v1996 = vpack.c.b16 %v1947, %v1946
        %v1997 = vpack.c.b16 %v1949, %v1948
        %v1998 = vpack.c.b16 %v1951, %v1950
        %v1999 = vpack.c.b16 %v1953, %v1952
        %v2000 = vpack.c.b16 %v1955, %v1954
        %v2001 = vpack.c.b16 %v1957, %v1956
        %v2002 = vpack.c.b16 %v1959, %v1958
        %v2003 = vpack.c.b16 %v1961, %v1960
        %v2004 = vpack.c.b16 %v1963, %v1962
        %v2005 = vpack.c.b16 %v1965, %v1964
        %v2006 = vpack.c.b16 %v1967, %v1966
        %v2007 = vpack.c.b16 %v1969, %v1968
        %v2008 = vpack.c.b16 %v1971, %v1970
        %v2009 = vpack.c.b16 %v1973, %v1972
        %v2010 = vpack.c.b16 %v1975, %v1974
        %v2011 = vpack.c.b16 %v1977, %v1976
        %v2012 = vpack.c.b16 %v1979, %v1978
        %v2013 = vpack.c.b16 %v1981, %v1980
        %2046 = vmatprep.subr.bf16.mxu0 0
        %2047 = vmatpush1.bf16.msra.mxu0 %v1982
        %2048 = vmatprep.subr.bf16.mxu0 0
        %2049 = vmatpush1.bf16.msra.mxu0 %v1983
        %2050 = vmatprep.subr.bf16.mxu0 0
        %2051 = vmatpush1.bf16.msra.mxu0 %v1984
        %2052 = vmatprep.subr.bf16.mxu0 0
        %2053 = vmatpush1.bf16.msra.mxu0 %v1985
        %2054 = vmatprep.subr.bf16.mxu0 0
        %2055 = vmatpush1.bf16.msra.mxu0 %v1986
        %2056 = vmatprep.subr.bf16.mxu0 0
        %2057 = vmatpush1.bf16.msra.mxu0 %v1987
        %2058 = vmatprep.subr.bf16.mxu0 0
        %2059 = vmatpush1.bf16.msra.mxu0 %v1988
        %2060 = vmatprep.subr.bf16.mxu0 0
        %2061 = vmatpush1.bf16.msra.mxu0 %v1989
        %2062 = vmatprep.subr.bf16.mxu0 0
        %2063 = vmatpush1.bf16.msra.mxu0 %v1990
        %2064 = vmatprep.subr.bf16.mxu0 0
        %2065 = vmatpush1.bf16.msra.mxu0 %v1991
        %2066 = vmatprep.subr.bf16.mxu0 0
        %2067 = vmatpush1.bf16.msra.mxu0 %v1992
        %2068 = vmatprep.subr.bf16.mxu0 0
        %2069 = vmatpush1.bf16.msra.mxu0 %v1993
        %2070 = vmatprep.subr.bf16.mxu0 0
        %2071 = vmatpush1.bf16.msra.mxu0 %v1994
        %2072 = vmatprep.subr.bf16.mxu0 0
        %2073 = vmatpush1.bf16.msra.mxu0 %v1995
        %2074 = vmatprep.subr.bf16.mxu0 0
        %2075 = vmatpush1.bf16.msra.mxu0 %v1996
        %2076 = vmatprep.subr.bf16.mxu0 0
        %2077 = vmatpush1.bf16.msra.mxu0 %v1997
        %2078 = vmatprep.mubr.bf16.mxu0 %v1780
        %2079 = vmatmul.mubr.bf16.gmra.mrb[0].mxu0 %v1779
        %v2080 = vpop.f32.mrb[0].mxu0
        %v2081 = vadd.f32 %v1852, %v2080
        %v2082 = vpop.f32.mrb[0].mxu0
        %v2083 = vpop.f32.mrb[0].mxu0
        %v2084 = vadd.f32 %v1852, %v2083
        %v2085 = vpop.f32.mrb[0].mxu0
        %2086 = vdwg.mxu0
        %2087 = vmatprep.subr.bf16.mxu0 0
        %2088 = vmatpush1.bf16.msra.mxu0 %v1998
        %2089 = vmatprep.subr.bf16.mxu0 0
        %2090 = vmatpush1.bf16.msra.mxu0 %v1999
        %2091 = vmatprep.subr.bf16.mxu0 0
        %2092 = vmatpush1.bf16.msra.mxu0 %v2000
        %2093 = vmatprep.subr.bf16.mxu0 0
        %2094 = vmatpush1.bf16.msra.mxu0 %v2001
        %2095 = vmatprep.subr.bf16.mxu0 0
        %2096 = vmatpush1.bf16.msra.mxu0 %v2002
        %2097 = vmatprep.subr.bf16.mxu0 0
        %2098 = vmatpush1.bf16.msra.mxu0 %v2003
        %2099 = vmatprep.subr.bf16.mxu0 0
        %2100 = vmatpush1.bf16.msra.mxu0 %v2004
        %2101 = vmatprep.subr.bf16.mxu0 0
        %2102 = vmatpush1.bf16.msra.mxu0 %v2005
        %2103 = vmatprep.subr.bf16.mxu0 0
        %2104 = vmatpush1.bf16.msra.mxu0 %v2006
        %2105 = vmatprep.subr.bf16.mxu0 0
        %2106 = vmatpush1.bf16.msra.mxu0 %v2007
        %2107 = vmatprep.subr.bf16.mxu0 0
        %2108 = vmatpush1.bf16.msra.mxu0 %v2008
        %2109 = vmatprep.subr.bf16.mxu0 0
        %2110 = vmatpush1.bf16.msra.mxu0 %v2009
        %2111 = vmatprep.subr.bf16.mxu0 0
        %2112 = vmatpush1.bf16.msra.mxu0 %v2010
        %2113 = vmatprep.subr.bf16.mxu0 0
        %2114 = vmatpush1.bf16.msra.mxu0 %v2011
        %2115 = vmatprep.subr.bf16.mxu0 0
        %2116 = vmatpush1.bf16.msra.mxu0 %v2012
        %2117 = vmatprep.subr.bf16.mxu0 0
        %2118 = vmatpush1.bf16.msra.mxu0 %v2013
        %2119 = vmatprep.mubr.bf16.mxu0 %v1782
        %2120 = vmatmul.mubr.bf16.gmra.mrb[0].mxu0 %v1781
        %v2121 = vpop.f32.mrb[0].mxu0
        %v2122 = vadd.f32 %v2081, %v2121
        %v2123 = vpop.f32.mrb[0].mxu0
        %v2124 = vpop.f32.mrb[0].mxu0
        %v2125 = vadd.f32 %v2084, %v2124
        %v2126 = vpop.f32.mrb[0].mxu0
        %2127 = vdwg.mxu0
        %v2128 = vadd.f32 %v1364, %v2122
        %v2129 = vadd.f32 %v1365, %v2125
        %v2130 = vld [vmem:[%s19] sm:$0x1]
        %v2131 = vld [vmem:[%s20] sm:$0x1]
        %2132 = vadd.xlane.f32.xlu0 %v2128
        %v2133 = vpop.xlane.xlu0 %2132
        %2134 = vadd.xlane.f32.xlu0 %v2129
        %v2135 = vpop.xlane.xlu0 %2134
        %v2136 = vmul.f32 %v2133, %v761
        %v2137 = vmul.f32 %v2135, %v761
        %v2138 = vsub.f32 %v2128, %v2136
        %v2139 = vsub.f32 %v2129, %v2137
        %v2140 = vmul.f32 %v2138, %v2138
        %v2141 = vmul.f32 %v2139, %v2139
        %2142 = vadd.xlane.f32.xlu0 %v2140
        %v2143 = vpop.xlane.xlu0 %2142
        %2144 = vadd.xlane.f32.xlu0 %v2141
        %v2145 = vpop.xlane.xlu0 %2144
        %v2146 = vmul.f32 %v2143, %v761
        %v2147 = vmul.f32 %v2145, %v761
        %v2148 = vadd.f32 %v2146, 1e-05
        %v2149 = vadd.f32 %v2147, 1e-05
        %v2150 = vrsqrt.pop %v2148
        %v2151 = vrsqrt.pop %v2149
        %v2152 = vmul.f32 %v2138, %v2150
        %v2153 = vmul.f32 %v2139, %v2151
        %v2155 = vlaneseq
        %v2156 = vshrl.u32 %v2155, 7
        %v2157 = vsub.s32 0, %v2156
        %v2158 = vrot.slane %v2130, %v2157
        %v2160 = vmul.f32 %v2152, %v2158
        %v2161 = vmul.f32 %v2153, %v2158
        %v2163 = vlaneseq
        %v2164 = vshrl.u32 %v2163, 7
        %v2165 = vsub.s32 0, %v2164
        %v2166 = vrot.slane %v2131, %v2165
        %v2168 = vadd.f32 %v2160, %v2166
        %v2169 = vadd.f32 %v2161, %v2166
        %v2170 = vld [vmem:[%s746] sm:$0x1]
        %v2172 = vsel %vm1182, %v2170, 0
        %2174 = vmatprep.subr.mxu0 0.0
        %2175 = vmatpush1.msra.mxu0 %v2168
        %2176 = vmatprep.subr.mxu0 0.0
        %2177 = vmatpush1.msra.mxu0 %v2169
        %2178 = vmatprep.subr.mxu0 0.0
        %2179 = vmatpush1.msra.mxu0 0.0
        %2180 = vmatprep.subr.mxu0 0.0
        %2181 = vmatpush1.msra.mxu0 0.0
        %2182 = vmatprep.subr.mxu0 0.0
        %2183 = vmatpush1.msra.mxu0 0.0
        %2184 = vmatprep.subr.mxu0 0.0
        %2185 = vmatpush1.msra.mxu0 0.0
        %2186 = vmatprep.subr.mxu0 0.0
        %2187 = vmatpush1.msra.mxu0 0.0
        %2188 = vmatprep.subr.mxu0 0.0
        %2189 = vmatpush1.msra.mxu0 0.0
        %2190 = vmatprep.subr.mxu0 0.0
        %2191 = vmatpush1.msra.mxu0 0.0
        %2192 = vmatprep.subr.mxu0 0.0
        %2193 = vmatpush1.msra.mxu0 0.0
        %2194 = vmatprep.subr.mxu0 0.0
        %2195 = vmatpush1.msra.mxu0 0.0
        %2196 = vmatprep.subr.mxu0 0.0
        %2197 = vmatpush1.msra.mxu0 0.0
        %2198 = vmatprep.subr.mxu0 0.0
        %2199 = vmatpush1.msra.mxu0 0.0
        %2200 = vmatprep.subr.mxu0 0.0
        %2201 = vmatpush1.msra.mxu0 0.0
        %2202 = vmatprep.subr.mxu0 0.0
        %2203 = vmatpush1.msra.mxu0 0.0
        %2204 = vmatprep.subr.mxu0 0.0
        %2205 = vmatpush1.msra.mxu0 0.0
        %2206 = vmatprep.subr.mxu0 0.0
        %2207 = vmatpush1.msra.mxu0 0.0
        %2208 = vmatprep.subr.mxu0 0.0
        %2209 = vmatpush1.msra.mxu0 0.0
        %2210 = vmatprep.subr.mxu0 0.0
        %2211 = vmatpush1.msra.mxu0 0.0
        %2212 = vmatprep.subr.mxu0 0.0
        %2213 = vmatpush1.msra.mxu0 0.0
        %2214 = vmatprep.subr.mxu0 0.0
        %2215 = vmatpush1.msra.mxu0 0.0
        %2216 = vmatprep.subr.mxu0 0.0
        %2217 = vmatpush1.msra.mxu0 0.0
        %2218 = vmatprep.subr.mxu0 0.0
        %2219 = vmatpush1.msra.mxu0 0.0
        %2220 = vmatprep.subr.mxu0 0.0
        %2221 = vmatpush1.msra.mxu0 0.0
        %2222 = vmatprep.subr.mxu0 0.0
        %2223 = vmatpush1.msra.mxu0 0.0
        %2224 = vmatprep.subr.mxu0 0.0
        %2225 = vmatpush1.msra.mxu0 0.0
        %2226 = vmatprep.subr.mxu0 0.0
        %2227 = vmatpush1.msra.mxu0 0.0
        %2228 = vmatprep.subr.mxu0 0.0
        %2229 = vmatpush1.msra.mxu0 0.0
        %2230 = vmatprep.subr.mxu0 0.0
        %2231 = vmatpush1.msra.mxu0 0.0
        %2232 = vmatprep.subr.mxu0 0.0
        %2233 = vmatpush1.msra.mxu0 0.0
        %2234 = vmatprep.subr.mxu0 0.0
        %2235 = vmatpush1.msra.mxu0 0.0
        %2236 = vmatprep.subr.mxu0 0.0
        %2237 = vmatpush1.msra.mxu0 0.0
        %2238 = vmatprep.mubr.f32.mxu0 0.0
        %2239 = vmatmul.mubr.f32.gmra.mrb[0].mxu0 %v2172
        %v2240 = vpop.f32.mrb[0].mxu0
        %v2241 = vadd.f32 0.0, %v2240
        %v2242 = vpop.f32.mrb[0].mxu0
        %2243 = vdwg.mxu0
        %vm2244 = vcmask 122880
        %v2245 = vsel %vm2244, %v2170, 0.0
        %2246 = vadd.xlane.f32.xlu0 %v2245
        %v2247 = vpop.xlane.xlu0 %2246
        %v2248 = vrot.slane %v2247, 4
        %v2249 = vadd.f32 %v2247, %v2248
        %v2250 = vrot.slane %v2249, 2
        %v2251 = vadd.f32 %v2249, %v2250
        %v2252 = vrot.slane %v2251, 1
        %v2253 = vadd.f32 %v2251, %v2252
        %s2254 = vtos %v2253
        %s2255 = sadd.f32 %s2254, 1e-10
        %v2256 = vstv %s2255
        %v2257 = vrcp.pop %v2256
        %v2258 = vmul.f32 %v2241, %v2257
        %v2259 = vpack.c.bf16 %v2258, %v2258
        %v2260 = vld [vmem:[%s21] sm:$0xf]
        %v2261 = vld [vmem:[%s21 + $0x4] sm:$0xf]
        %v2262 = vld [vmem:[%s21 + $0x8] sm:$0xf]
        %v2263 = vld [vmem:[%s21 + $0xc] sm:$0xf]
        %v2264 = vld [vmem:[%s21 + $0x10] sm:$0xf]
        %v2265 = vld [vmem:[%s21 + $0x14] sm:$0xf]
        %v2266 = vld [vmem:[%s21 + $0x18] sm:$0xf]
        %v2267 = vld [vmem:[%s21 + $0x1c] sm:$0xf]
        %v2268 = vld [vmem:[%s21 + $0x20] sm:$0xf]
        %v2269 = vld [vmem:[%s21 + $0x24] sm:$0xf]
        %v2270 = vld [vmem:[%s21 + $0x28] sm:$0xf]
        %v2271 = vld [vmem:[%s21 + $0x2c] sm:$0xf]
        %v2272 = vld [vmem:[%s21 + $0x30] sm:$0xf]
        %v2273 = vld [vmem:[%s21 + $0x34] sm:$0xf]
        %v2274 = vld [vmem:[%s21 + $0x38] sm:$0xf]
        %v2275 = vld [vmem:[%s21 + $0x3c] sm:$0xf]
        %v2276 = vld [vmem:[%s22] sm:$0x1]
        %v2293 = vunpack.c.l.b16 %v2260
        %v2294 = vunpack.c.l.b16 %v2261
        %v2295 = vunpack.c.l.b16 %v2262
        %v2296 = vunpack.c.l.b16 %v2263
        %v2297 = vunpack.c.l.b16 %v2264
        %v2298 = vunpack.c.l.b16 %v2265
        %v2299 = vunpack.c.l.b16 %v2266
        %v2300 = vunpack.c.l.b16 %v2267
        %v2301 = vunpack.c.l.b16 %v2268
        %v2302 = vunpack.c.l.b16 %v2269
        %v2303 = vunpack.c.l.b16 %v2270
        %v2304 = vunpack.c.l.b16 %v2271
        %v2305 = vunpack.c.l.b16 %v2272
        %v2306 = vunpack.c.l.b16 %v2273
        %v2307 = vunpack.c.l.b16 %v2274
        %v2308 = vunpack.c.l.b16 %v2275
        %v2309 = vpack.c.b16 %v2294, %v2293
        %v2310 = vpack.c.b16 %v2296, %v2295
        %v2311 = vpack.c.b16 %v2298, %v2297
        %v2312 = vpack.c.b16 %v2300, %v2299
        %v2313 = vpack.c.b16 %v2302, %v2301
        %v2314 = vpack.c.b16 %v2304, %v2303
        %v2315 = vpack.c.b16 %v2306, %v2305
        %v2316 = vpack.c.b16 %v2308, %v2307
        %2325 = vmatprep.subr.bf16.mxu0 0
        %2326 = vmatpush1.bf16.msra.mxu0 %v2309
        %2327 = vmatprep.subr.bf16.mxu0 0
        %2328 = vmatpush1.bf16.msra.mxu0 %v2310
        %2329 = vmatprep.subr.bf16.mxu0 0
        %2330 = vmatpush1.bf16.msra.mxu0 %v2311
        %2331 = vmatprep.subr.bf16.mxu0 0
        %2332 = vmatpush1.bf16.msra.mxu0 %v2312
        %2333 = vmatprep.subr.bf16.mxu0 0
        %2334 = vmatpush1.bf16.msra.mxu0 %v2313
        %2335 = vmatprep.subr.bf16.mxu0 0
        %2336 = vmatpush1.bf16.msra.mxu0 %v2314
        %2337 = vmatprep.subr.bf16.mxu0 0
        %2338 = vmatpush1.bf16.msra.mxu0 %v2315
        %2339 = vmatprep.subr.bf16.mxu0 0
        %2340 = vmatpush1.bf16.msra.mxu0 %v2316
        %2341 = vmatprep.subr.bf16.mxu0 0
        %2342 = vmatpush1.bf16.msra.mxu0 0
        %2343 = vmatprep.subr.bf16.mxu0 0
        %2344 = vmatpush1.bf16.msra.mxu0 0
        %2345 = vmatprep.subr.bf16.mxu0 0
        %2346 = vmatpush1.bf16.msra.mxu0 0
        %2347 = vmatprep.subr.bf16.mxu0 0
        %2348 = vmatpush1.bf16.msra.mxu0 0
        %2349 = vmatprep.subr.bf16.mxu0 0
        %2350 = vmatpush1.bf16.msra.mxu0 0
        %2351 = vmatprep.subr.bf16.mxu0 0
        %2352 = vmatpush1.bf16.msra.mxu0 0
        %2353 = vmatprep.subr.bf16.mxu0 0
        %2354 = vmatpush1.bf16.msra.mxu0 0
        %2355 = vmatprep.subr.bf16.mxu0 0
        %2356 = vmatpush1.bf16.msra.mxu0 0
        %2357 = vmatprep.mubr.bf16.mxu0 0
        %2358 = vmatmul.mubr.bf16.gmra.mrb[0].mxu0 %v2259
        %v2359 = vpop.f32.mrb[0].mxu0
        %v2360 = vadd.f32 %v2276, %v2359
        %v2361 = vpop.f32.mrb[0].mxu0
        %v2362 = vpop.f32.mrb[0].mxu0
        %v2363 = vpop.f32.mrb[0].mxu0
        %2364 = vdwg.mxu0
        %v2365 = vlaneseq
        %v2366 = vand.u32 %v2365, 127
        %vm2367 = vcmp.lt.s32.totalorder %v2366, 4
        %v2368 = vsel %vm2367, %v2360, -1e+30
        %vm2369 = vcmask 1040384
        %v2370 = vsel %vm2369, %v2368, -inf
        %2371 = vmax.xlane.f32.xlu0 %v2370
        %v2372 = vpop.xlane.xlu0 %2371
        %v2373 = vsub.f32 %v2368, %v2372
        %v2374 = vmul.f32 %v2373, 1.442695
        %v2375 = vpow.pop %v2374
        %v2376 = vsel %vm2369, %v2375, 0.0
        %2377 = vadd.xlane.f32.xlu0 %v2376
        %v2378 = vpop.xlane.xlu0 %2377
        %v2379 = vlog2.pop %v2378
        %v2380 = vmul.f32 %v2379, 0.6931472
        %v2381 = vsub.f32 %v2373, %v2380
        %2382 = vst [vmem:[%s743] sm:$0x1] %v2381
        %s2383 = sand.u32 %s540, 1
        %s2384 = scalar_lea.sflag [#allocation4], %s2383
        %s2385 = sand.u32 %s540, 1
        %s2386 = scalar_lea.vmem [#allocation7], %s2385
        // Predicated region
        $region121: #{model_forward.1} parent=111 // pred_check
          %p2387 = pneg %p550
        $region122: #{model_forward.1} parent=111 // pred_check_branch
          %2389 = sbr.rel (%p2387) target = $region124
        $region123: #{model_forward.1} parent=111 // pred_region
          %s2391 = ssub.s32 16, 16
          %2392 = vsyncadd %s2384, %s2391
          %s2393 = smul.addr %s39, 16
          %s2394 = scalar_lea.hbm %s23, %s2393
          %s2396 = sshll.u32 %s2386, 4
          %s2397 = int_to_ptr.vmem [resolvable:$true] %s2396
          %2399 = dma.vmem_to_hbm [thread:$0]  %s2397, 16, %s2394, %s2384
        $region124: #{model_forward.1} parent=111 // pred_fallthru
          _
      $region112: #{model_forward.1} parent=5 // pred_fallthru
        _
      %p2400 = scmp.le.s32.totalorder 2, %s34
      // Predicated region
      $region125: #{model_forward.1} parent=5 // pred_check
        %p2401 = pneg %p2400
      $region126: #{model_forward.1} parent=5 // pred_check_branch
        %2403 = sbr.rel (%p2401) target = $region128
      $region127: #{model_forward.1} parent=5 // pred_region
        %s2404 = ssub.s32 %s34, 2
        // Predicated region
        $region129: #{model_forward.1} parent=127 // pred_check
          %p2405 = pneg %p556
        $region130: #{model_forward.1} parent=127 // pred_check_branch
          %2407 = sbr.rel (%p2405) target = $region132
        $region131: #{model_forward.1} parent=127 // pred_region
          %s2408 = sand.u32 %s541, 1
          %s2409 = scalar_lea.sflag [#allocation4], %s2408
          %s2410 = sand.u32 %s541, 1
          %s2411 = scalar_lea.vmem [#allocation7], %s2410
          %2412 = dma.done %s2409, 16
        $region132: #{model_forward.1} parent=127 // pred_fallthru
          _
      $region128: #{model_forward.1} parent=5 // pred_fallthru
        _
    $region6: #{model_forward.1} parent=1 // loop_footer
      %s38 = sadd.s32 1, %s34
    $region7: #{model_forward.1} parent=1 // loop_footer_branch
      %33 = sbr.rel target = $region3
    $region8: #{model_forward.1} parent=1 // loop_exit
      _
    %2413 = vsyncpa [#allocation3], 1
    %s2414 = scalar_lea.sflag [#allocation3], 1
    %2415 = vsyncpa %s2414, 1
    %2416 = vsyncpa [#allocation6], 1
    %2417 = vsyncpa [#allocation4], 1
    %s2418 = scalar_lea.sflag [#allocation4], 1
    %2419 = vsyncpa %s2418, 1

</llo_original>
